<compile_context>
chip_gen: v6e
topology: v6e:2x2x1
jax: 0.10.0
libtpu: 0.0.40
codegen_flags: <defaults>
</compile_context>

<pallas_src>
import math
from functools import partial

import jax
import jax.numpy as jnp
import numpy as np
from jax.experimental import pallas as pl
from jax.experimental.pallas import tpu as pltpu

LN_EPS = 1e-5  # nn.LayerNorm default (NonHalfLayerNorm keeps eps / computes in f32)


def _layer_norm(x, w, b):
    mu = jnp.mean(x, axis=-1, keepdims=True)
    var = jnp.mean((x - mu) ** 2, axis=-1, keepdims=True)
    return (x - mu) * jax.lax.rsqrt(var + LN_EPS) * w + b


def _gelu(x):
    # TODO(synk): the block's act_layer is not pinned by the reference (CLIP uses
    # QuickGELU, TIMM uses exact erf GELU); tanh-approximate GELU is used here
    # (max abs deviation from exact GELU ~3e-4).
    c = math.sqrt(2.0 / math.pi)
    return 0.5 * x * (1.0 + jnp.tanh(c * (x + 0.044715 * x * x * x)))


def peft_block_kernel(
    x_ref, ln1w_ref, ln1b_ref,
    wqkv_ref, bqkv_ref, wo_ref, bo_ref,
    ln2w_ref, ln2b_ref,
    w1_ref, b1_ref, w2_ref, b2_ref,
    out_ref,
    *, num_heads: int,
):
    _, L, D = x_ref.shape
    H = num_heads
    hd = D // H
    scale = 1.0 / math.sqrt(hd)
    f32 = jnp.float32
    bf16 = jnp.bfloat16

    x = x_ref[0]                                            # (L, D) f32

    # ---------------- attention branch (pre-norm) ----------------
    y = _layer_norm(x, ln1w_ref[...], ln1b_ref[...])        # f32
    # fused q/k/v projection: one MXU pass over y (bf16 operands, f32 acc)
    qkv = jnp.dot(y.astype(bf16), wqkv_ref[...],
                  preferred_element_type=f32) + bqkv_ref[...]   # (L, 3D) f32

    def split_heads(t):                                     # (L, D) -> (H, L, hd)
        return jnp.stack(
            [t[:, h * hd:(h + 1) * hd] for h in range(H)], axis=0
        ).astype(bf16)

    qh = split_heads(qkv[:, 0 * D:1 * D])
    kh = split_heads(qkv[:, 1 * D:2 * D])
    vh = split_heads(qkv[:, 2 * D:3 * D])

    # batched scaled-dot-product attention over all heads at once
    s = jnp.einsum("hqd,hkd->hqk", qh, kh,
                   preferred_element_type=f32) * scale      # (H, L, L) f32
    s = s - jnp.max(s, axis=-1, keepdims=True)
    p = jnp.exp(s)
    p = p * pl.reciprocal(jnp.sum(p, axis=-1, keepdims=True), approx=True)
    o = jnp.einsum("hqk,hkd->hqd", p.astype(bf16), vh,
                   preferred_element_type=f32)              # (H, L, hd) f32

    # out-proj: accumulate per-head slabs of W_o rows (avoids reassembling the
    # (L, D) head-concat in lanes; math is identical to concat @ W_o).
    attn = jnp.zeros((L, D), f32)
    for h in range(H):
        attn = attn + jnp.dot(o[h].astype(bf16),
                              wo_ref[h * hd:(h + 1) * hd, :],
                              preferred_element_type=f32)
    attn = attn + bo_ref[...]
    x1 = x + attn                                           # residual (f32)

    # ---------------- MLP branch (pre-norm) ----------------
    y2 = _layer_norm(x1, ln2w_ref[...], ln2b_ref[...])
    h1 = jnp.dot(y2.astype(bf16), w1_ref[...],
                 preferred_element_type=f32) + b1_ref[...]
    h1 = _gelu(h1)                                          # f32 pointwise
    mlp = jnp.dot(h1.astype(bf16), w2_ref[...],
                  preferred_element_type=f32) + b2_ref[...]

    out_ref[0] = x1 + mlp                                   # residual (f32)


def peft_block_forward(x_nld, p, num_heads):
    """x_nld: (N, L, D) float32.  p holds torch-layout weights (out, in)."""
    N, L, D = x_nld.shape
    f32, bf16 = jnp.float32, jnp.bfloat16

    args = (
        x_nld,
        p["ln1_w"].reshape(1, D).astype(f32), p["ln1_b"].reshape(1, D).astype(f32),
        p["w_in"].T.astype(bf16),                      # (D, 3D) fused qkv weight
        p["b_in"].reshape(1, 3 * D).astype(f32),
        p["w_out"].T.astype(bf16),                     # (D, D)
        p["b_out"].reshape(1, D).astype(f32),
        p["ln2_w"].reshape(1, D).astype(f32), p["ln2_b"].reshape(1, D).astype(f32),
        p["w1"].T.astype(bf16),                        # (D, hidden)
        p["b1"].reshape(1, -1).astype(f32),
        p["w2"].T.astype(bf16),                        # (hidden, D)
        p["b2"].reshape(1, D).astype(f32),
    )

    def const_spec(a):
        nd = a.ndim
        return pl.BlockSpec(a.shape, lambda n, nd=nd: (0,) * nd)

    x_spec = pl.BlockSpec((1, L, D), lambda n: (n, 0, 0))
    in_specs = [x_spec] + [const_spec(a) for a in args[1:]]
    out_spec = pl.BlockSpec((1, L, D), lambda n: (n, 0, 0))

    return pl.pallas_call(
        partial(peft_block_kernel, num_heads=num_heads),
        grid=(N,),
        in_specs=in_specs,
        out_specs=out_spec,
        out_shape=jax.ShapeDtypeStruct((N, L, D), jnp.float32),
        compiler_params=pltpu.CompilerParams(
            dimension_semantics=("parallel",),          # shards across v7x's 2 TCs
            vmem_limit_bytes=64 * 1024 * 1024,
        ),
    )(*args)


@partial(jax.jit, static_argnums=(2,))
def peft_transformer_forward(x_lnd, blocks_params, num_heads):
    """x_lnd: (L, N, D) seq-first, matching the PyTorch module's input."""
    x = jnp.transpose(x_lnd, (1, 0, 2))                 # (N, L, D) for the kernel
    for p in blocks_params:
        x = peft_block_forward(x, p, num_heads)
    return jnp.transpose(x, (1, 0, 2))                  # back to (L, N, D)


# ---------------- deterministic synthetic parameters ----------------
def init_block_params(key, D, hidden):
    ks = jax.random.split(key, 8)
    std = 0.02
    f32 = jnp.float32
    return dict(
        ln1_w=jnp.ones((D,), f32),
        ln1_b=jnp.zeros((D,), f32),
        w_in=std * jax.random.normal(ks[0], (3 * D, D), f32),
        b_in=0.01 * jax.random.normal(ks[1], (3 * D,), f32),
        w_out=std * jax.random.normal(ks[2], (D, D), f32),
        b_out=0.01 * jax.random.normal(ks[3], (D,), f32),
        ln2_w=jnp.ones((D,), f32),
        ln2_b=jnp.zeros((D,), f32),
        w1=std * jax.random.normal(ks[4], (hidden, D), f32),
        b1=0.01 * jax.random.normal(ks[5], (hidden,), f32),
        w2=std * jax.random.normal(ks[6], (D, hidden), f32),
        b2=0.01 * jax.random.normal(ks[7], (D,), f32),
    )


# ---------------- pure-JAX f32 reference (mirrors the PyTorch forward) ----------------
def ref_block(x, p, H):
    L, N, D = x.shape
    hd = D // H
    identity = x
    y = _layer_norm(x, p["ln1_w"], p["ln1_b"])
    qkv = y @ p["w_in"].T + p["b_in"]
    q, k, v = jnp.split(qkv, 3, axis=-1)
    q = q.reshape(L, N * H, hd).transpose(1, 0, 2)
    k = k.reshape(L, N * H, hd).transpose(1, 0, 2)
    v = v.reshape(L, N * H, hd).transpose(1, 0, 2)
    s = jnp.einsum("bld,bmd->blm", q, k) / math.sqrt(hd)
    attn = jax.nn.softmax(s, axis=-1)
    o = jnp.einsum("blm,bmd->bld", attn, v)
    o = o.transpose(1, 0, 2).reshape(L, N, D)
    o = o @ p["w_out"].T + p["b_out"]
    x = identity + o
    identity = x
    y2 = _layer_norm(x, p["ln2_w"], p["ln2_b"])
    h = _gelu(y2 @ p["w1"].T + p["b1"])
    h = h @ p["w2"].T + p["b2"]
    return identity + h


if __name__ == "__main__":
    L, N, D, H = 8, 2, 128, 4          # seq, batch, embed, heads (head_dim = 32)
    hidden = 4 * D
    num_blocks = 2

    key = jax.random.PRNGKey(0)
    kx, kp = jax.random.split(key)
    x = jax.random.normal(kx, (L, N, D), jnp.float32)
    blocks = [init_block_params(k, D, hidden) for k in jax.random.split(kp, num_blocks)]

    out = peft_transformer_forward(x, blocks, H)
    out = jax.block_until_ready(out)

    ref = x
    for p in blocks:
        ref = ref_block(ref, p, H)
    # tolerance accounts for bf16 MXU operands (f32 accumulation) vs f32 reference
    np.testing.assert_allclose(np.asarray(out), np.asarray(ref), rtol=1e-2, atol=1e-2)

    print("KERNEL_OK")
</pallas_src>

<mosaic_0001>
module attributes {stable_mosaic.version = 11 : i64} {
  func.func @peft_block_kernel(%arg0: i32, %arg1: memref<1x8x128xf32, #tpu.memory_space<vmem>>, %arg2: memref<1x128xf32, #tpu.memory_space<vmem>>, %arg3: memref<1x128xf32, #tpu.memory_space<vmem>>, %arg4: memref<128x384xbf16, #tpu.memory_space<vmem>>, %arg5: memref<1x384xf32, #tpu.memory_space<vmem>>, %arg6: memref<128x128xbf16, #tpu.memory_space<vmem>>, %arg7: memref<1x128xf32, #tpu.memory_space<vmem>>, %arg8: memref<1x128xf32, #tpu.memory_space<vmem>>, %arg9: memref<1x128xf32, #tpu.memory_space<vmem>>, %arg10: memref<128x512xbf16, #tpu.memory_space<vmem>>, %arg11: memref<1x512xf32, #tpu.memory_space<vmem>>, %arg12: memref<512x128xbf16, #tpu.memory_space<vmem>>, %arg13: memref<1x128xf32, #tpu.memory_space<vmem>>, %arg14: memref<1x8x128xf32, #tpu.memory_space<vmem>>) attributes {dimension_semantics = [#tpu.dimension_semantics<parallel>], iteration_bounds = array<i64: 2>, scalar_prefetch = 0 : i64, scratch_operands = 0 : i64, tpu.core_type = #tpu.core_type<tc>, window_params = [{transform_indices = @transform_0, window_bounds = array<i64: 1, 8, 128>}, {pipeline_mode = #tpu.pipeline_mode<synchronous>, transform_indices = @transform_1, window_bounds = array<i64: 1, 128>}, {pipeline_mode = #tpu.pipeline_mode<synchronous>, transform_indices = @transform_2, window_bounds = array<i64: 1, 128>}, {pipeline_mode = #tpu.pipeline_mode<synchronous>, transform_indices = @transform_3, window_bounds = array<i64: 128, 384>}, {pipeline_mode = #tpu.pipeline_mode<synchronous>, transform_indices = @transform_4, window_bounds = array<i64: 1, 384>}, {pipeline_mode = #tpu.pipeline_mode<synchronous>, transform_indices = @transform_5, window_bounds = array<i64: 128, 128>}, {pipeline_mode = #tpu.pipeline_mode<synchronous>, transform_indices = @transform_6, window_bounds = array<i64: 1, 128>}, {pipeline_mode = #tpu.pipeline_mode<synchronous>, transform_indices = @transform_7, window_bounds = array<i64: 1, 128>}, {pipeline_mode = #tpu.pipeline_mode<synchronous>, transform_indices = @transform_8, window_bounds = array<i64: 1, 128>}, {pipeline_mode = #tpu.pipeline_mode<synchronous>, transform_indices = @transform_9, window_bounds = array<i64: 128, 512>}, {pipeline_mode = #tpu.pipeline_mode<synchronous>, transform_indices = @transform_10, window_bounds = array<i64: 1, 512>}, {pipeline_mode = #tpu.pipeline_mode<synchronous>, transform_indices = @transform_11, window_bounds = array<i64: 512, 128>}, {pipeline_mode = #tpu.pipeline_mode<synchronous>, transform_indices = @transform_12, window_bounds = array<i64: 1, 128>}, {transform_indices = @transform_13, window_bounds = array<i64: 1, 8, 128>}]} {
    %c0 = arith.constant 0 : index
    %c0_0 = arith.constant 0 : index
    %c0_1 = arith.constant 0 : index
    %0 = vector.load %arg1[%c0, %c0_0, %c0_1] : memref<1x8x128xf32, #tpu.memory_space<vmem>>, vector<1x8x128xf32>
    %1 = vector.shape_cast %0 : vector<1x8x128xf32> to vector<8x128xf32>
    %c0_2 = arith.constant 0 : index
    %c0_3 = arith.constant 0 : index
    %2 = vector.load %arg2[%c0_2, %c0_3] : memref<1x128xf32, #tpu.memory_space<vmem>>, vector<1x128xf32>
    %c0_4 = arith.constant 0 : index
    %c0_5 = arith.constant 0 : index
    %3 = vector.load %arg3[%c0_4, %c0_5] : memref<1x128xf32, #tpu.memory_space<vmem>>, vector<1x128xf32>
    %cst = arith.constant dense<0.000000e+00> : vector<8xf32>
    %4 = vector.multi_reduction <add>, %1, %cst [1] : vector<8x128xf32> to vector<8xf32>
    %5 = vector.shape_cast %4 : vector<8xf32> to vector<8x1xf32>
    %cst_6 = arith.constant 1.280000e+02 : f32
    %6 = vector.broadcast %cst_6 : f32 to vector<8x1xf32>
    %7 = arith.divf %5, %6 : vector<8x1xf32>
    %8 = vector.broadcast %7 : vector<8x1xf32> to vector<8x128xf32>
    %9 = arith.subf %1, %8 : vector<8x128xf32>
    %10 = arith.mulf %9, %9 : vector<8x128xf32>
    %cst_7 = arith.constant dense<0.000000e+00> : vector<8xf32>
    %11 = vector.multi_reduction <add>, %10, %cst_7 [1] : vector<8x128xf32> to vector<8xf32>
    %12 = vector.shape_cast %11 : vector<8xf32> to vector<8x1xf32>
    %cst_8 = arith.constant 1.280000e+02 : f32
    %13 = vector.broadcast %cst_8 : f32 to vector<8x1xf32>
    %14 = arith.divf %12, %13 : vector<8x1xf32>
    %15 = vector.broadcast %7 : vector<8x1xf32> to vector<8x128xf32>
    %16 = arith.subf %1, %15 : vector<8x128xf32>
    %cst_9 = arith.constant 9.99999974E-6 : f32
    %17 = vector.broadcast %cst_9 : f32 to vector<8x1xf32>
    %18 = arith.addf %14, %17 : vector<8x1xf32>
    %19 = math.rsqrt %18 : vector<8x1xf32>
    %20 = vector.broadcast %19 : vector<8x1xf32> to vector<8x128xf32>
    %21 = arith.mulf %16, %20 : vector<8x128xf32>
    %22 = vector.broadcast %2 : vector<1x128xf32> to vector<8x128xf32>
    %23 = arith.mulf %21, %22 : vector<8x128xf32>
    %24 = vector.broadcast %3 : vector<1x128xf32> to vector<8x128xf32>
    %25 = arith.addf %23, %24 : vector<8x128xf32>
    %26 = arith.truncf %25 : vector<8x128xf32> to vector<8x128xbf16>
    %c0_10 = arith.constant 0 : index
    %c0_11 = arith.constant 0 : index
    %27 = vector.load %arg4[%c0_10, %c0_11] : memref<128x384xbf16, #tpu.memory_space<vmem>>, vector<128x384xbf16>
    %cst_12 = arith.constant dense<0.000000e+00> : vector<8x384xf32>
    %28 = tpu.matmul %26, %27, %cst_12 {dimension_numbers = #tpu.dot_dimension_numbers<[1], [0], [0], [1], [0, 0, 1, 1], [], []>} : vector<8x128xbf16>, vector<128x384xbf16>, vector<8x384xf32> -> vector<8x384xf32>
    %c0_13 = arith.constant 0 : index
    %c0_14 = arith.constant 0 : index
    %29 = vector.load %arg5[%c0_13, %c0_14] : memref<1x384xf32, #tpu.memory_space<vmem>>, vector<1x384xf32>
    %30 = vector.broadcast %29 : vector<1x384xf32> to vector<8x384xf32>
    %31 = arith.addf %28, %30 : vector<8x384xf32>
    %32 = vector.extract_strided_slice %31 {offsets = [0, 0], sizes = [8, 128], strides = [1, 1]} : vector<8x384xf32> to vector<8x128xf32>
    %33 = vector.extract_strided_slice %32 {offsets = [0, 0], sizes = [8, 32], strides = [1, 1]} : vector<8x128xf32> to vector<8x32xf32>
    %34 = vector.extract_strided_slice %32 {offsets = [0, 32], sizes = [8, 32], strides = [1, 1]} : vector<8x128xf32> to vector<8x32xf32>
    %35 = vector.extract_strided_slice %32 {offsets = [0, 64], sizes = [8, 32], strides = [1, 1]} : vector<8x128xf32> to vector<8x32xf32>
    %36 = vector.extract_strided_slice %32 {offsets = [0, 96], sizes = [8, 32], strides = [1, 1]} : vector<8x128xf32> to vector<8x32xf32>
    %37 = vector.shape_cast %33 : vector<8x32xf32> to vector<1x8x32xf32>
    %38 = vector.shape_cast %34 : vector<8x32xf32> to vector<1x8x32xf32>
    %39 = vector.shape_cast %35 : vector<8x32xf32> to vector<1x8x32xf32>
    %40 = vector.shape_cast %36 : vector<8x32xf32> to vector<1x8x32xf32>
    %41 = tpu.concatenate %37, %38, %39, %40 in 0 : vector<1x8x32xf32>, vector<1x8x32xf32>, vector<1x8x32xf32>, vector<1x8x32xf32> -> vector<4x8x32xf32>
    %42 = arith.truncf %41 : vector<4x8x32xf32> to vector<4x8x32xbf16>
    %43 = vector.extract_strided_slice %31 {offsets = [0, 128], sizes = [8, 128], strides = [1, 1]} : vector<8x384xf32> to vector<8x128xf32>
    %44 = vector.extract_strided_slice %43 {offsets = [0, 0], sizes = [8, 32], strides = [1, 1]} : vector<8x128xf32> to vector<8x32xf32>
    %45 = vector.extract_strided_slice %43 {offsets = [0, 32], sizes = [8, 32], strides = [1, 1]} : vector<8x128xf32> to vector<8x32xf32>
    %46 = vector.extract_strided_slice %43 {offsets = [0, 64], sizes = [8, 32], strides = [1, 1]} : vector<8x128xf32> to vector<8x32xf32>
    %47 = vector.extract_strided_slice %43 {offsets = [0, 96], sizes = [8, 32], strides = [1, 1]} : vector<8x128xf32> to vector<8x32xf32>
    %48 = vector.shape_cast %44 : vector<8x32xf32> to vector<1x8x32xf32>
    %49 = vector.shape_cast %45 : vector<8x32xf32> to vector<1x8x32xf32>
    %50 = vector.shape_cast %46 : vector<8x32xf32> to vector<1x8x32xf32>
    %51 = vector.shape_cast %47 : vector<8x32xf32> to vector<1x8x32xf32>
    %52 = tpu.concatenate %48, %49, %50, %51 in 0 : vector<1x8x32xf32>, vector<1x8x32xf32>, vector<1x8x32xf32>, vector<1x8x32xf32> -> vector<4x8x32xf32>
    %53 = arith.truncf %52 : vector<4x8x32xf32> to vector<4x8x32xbf16>
    %54 = vector.extract_strided_slice %31 {offsets = [0, 256], sizes = [8, 128], strides = [1, 1]} : vector<8x384xf32> to vector<8x128xf32>
    %55 = vector.extract_strided_slice %54 {offsets = [0, 0], sizes = [8, 32], strides = [1, 1]} : vector<8x128xf32> to vector<8x32xf32>
    %56 = vector.extract_strided_slice %54 {offsets = [0, 32], sizes = [8, 32], strides = [1, 1]} : vector<8x128xf32> to vector<8x32xf32>
    %57 = vector.extract_strided_slice %54 {offsets = [0, 64], sizes = [8, 32], strides = [1, 1]} : vector<8x128xf32> to vector<8x32xf32>
    %58 = vector.extract_strided_slice %54 {offsets = [0, 96], sizes = [8, 32], strides = [1, 1]} : vector<8x128xf32> to vector<8x32xf32>
    %59 = vector.shape_cast %55 : vector<8x32xf32> to vector<1x8x32xf32>
    %60 = vector.shape_cast %56 : vector<8x32xf32> to vector<1x8x32xf32>
    %61 = vector.shape_cast %57 : vector<8x32xf32> to vector<1x8x32xf32>
    %62 = vector.shape_cast %58 : vector<8x32xf32> to vector<1x8x32xf32>
    %63 = tpu.concatenate %59, %60, %61, %62 in 0 : vector<1x8x32xf32>, vector<1x8x32xf32>, vector<1x8x32xf32>, vector<1x8x32xf32> -> vector<4x8x32xf32>
    %64 = arith.truncf %63 : vector<4x8x32xf32> to vector<4x8x32xbf16>
    "tpu.trace_start"() <{level = 10 : i32, message = "hqd,hkd->hqk"}> : () -> ()
    %cst_15 = arith.constant dense<0.000000e+00> : vector<4x8x8xf32>
    %65 = tpu.matmul %42, %53, %cst_15 {dimension_numbers = #tpu.dot_dimension_numbers<[2], [2], [1], [1], [0, 0, 0, 1, 1, 1], [0], [0]>} : vector<4x8x32xbf16>, vector<4x8x32xbf16>, vector<4x8x8xf32> -> vector<4x8x8xf32>
    "tpu.trace_stop"() : () -> ()
    %cst_16 = arith.constant 0.176776692 : f32
    %66 = vector.broadcast %cst_16 : f32 to vector<4x8x8xf32>
    %67 = arith.mulf %65, %66 : vector<4x8x8xf32>
    %cst_17 = arith.constant dense<0xFF800000> : vector<4x8xf32>
    %68 = vector.multi_reduction <maximumf>, %67, %cst_17 [2] : vector<4x8x8xf32> to vector<4x8xf32>
    %69 = vector.shape_cast %68 : vector<4x8xf32> to vector<4x8x1xf32>
    %70 = vector.broadcast %69 : vector<4x8x1xf32> to vector<4x8x8xf32>
    %71 = arith.subf %67, %70 : vector<4x8x8xf32>
    %72 = math.exp %71 : vector<4x8x8xf32>
    %cst_18 = arith.constant dense<0.000000e+00> : vector<4x8xf32>
    %73 = vector.multi_reduction <add>, %72, %cst_18 [2] : vector<4x8x8xf32> to vector<4x8xf32>
    %74 = vector.shape_cast %73 : vector<4x8xf32> to vector<4x8x1xf32>
    %75 = tpu.reciprocal %74 {approx = true} : vector<4x8x1xf32> -> vector<4x8x1xf32>
    %76 = vector.broadcast %75 : vector<4x8x1xf32> to vector<4x8x8xf32>
    %77 = arith.mulf %72, %76 : vector<4x8x8xf32>
    %78 = arith.truncf %77 : vector<4x8x8xf32> to vector<4x8x8xbf16>
    "tpu.trace_start"() <{level = 10 : i32, message = "hqk,hkd->hqd"}> : () -> ()
    %cst_19 = arith.constant dense<0.000000e+00> : vector<4x8x32xf32>
    %79 = tpu.matmul %78, %64, %cst_19 {dimension_numbers = #tpu.dot_dimension_numbers<[2], [1], [1], [2], [0, 0, 0, 1, 1, 2], [0], [0]>} : vector<4x8x8xbf16>, vector<4x8x32xbf16>, vector<4x8x32xf32> -> vector<4x8x32xf32>
    %cst_20 = arith.constant 0.000000e+00 : f32
    "tpu.trace_stop"() : () -> ()
    %80 = vector.broadcast %cst_20 : f32 to vector<8x128xf32>
    %81 = vector.extract_strided_slice %79 {offsets = [0, 0, 0], sizes = [1, 8, 32], strides = [1, 1, 1]} : vector<4x8x32xf32> to vector<1x8x32xf32>
    %82 = vector.shape_cast %81 : vector<1x8x32xf32> to vector<8x32xf32>
    %83 = arith.truncf %82 : vector<8x32xf32> to vector<8x32xbf16>
    %c0_21 = arith.constant 0 : index
    %c0_22 = arith.constant 0 : index
    %84 = vector.load %arg6[%c0_21, %c0_22] : memref<128x128xbf16, #tpu.memory_space<vmem>>, vector<32x128xbf16>
    %cst_23 = arith.constant dense<0.000000e+00> : vector<8x128xf32>
    %85 = tpu.matmul %83, %84, %cst_23 {dimension_numbers = #tpu.dot_dimension_numbers<[1], [0], [0], [1], [0, 0, 1, 1], [], []>} : vector<8x32xbf16>, vector<32x128xbf16>, vector<8x128xf32> -> vector<8x128xf32>
    %86 = arith.addf %80, %85 : vector<8x128xf32>
    %87 = vector.extract_strided_slice %79 {offsets = [1, 0, 0], sizes = [1, 8, 32], strides = [1, 1, 1]} : vector<4x8x32xf32> to vector<1x8x32xf32>
    %88 = vector.shape_cast %87 : vector<1x8x32xf32> to vector<8x32xf32>
    %89 = arith.truncf %88 : vector<8x32xf32> to vector<8x32xbf16>
    %c32 = arith.constant 32 : index
    %c0_24 = arith.constant 0 : index
    %90 = vector.load %arg6[%c32, %c0_24] : memref<128x128xbf16, #tpu.memory_space<vmem>>, vector<32x128xbf16>
    %cst_25 = arith.constant dense<0.000000e+00> : vector<8x128xf32>
    %91 = tpu.matmul %89, %90, %cst_25 {dimension_numbers = #tpu.dot_dimension_numbers<[1], [0], [0], [1], [0, 0, 1, 1], [], []>} : vector<8x32xbf16>, vector<32x128xbf16>, vector<8x128xf32> -> vector<8x128xf32>
    %92 = arith.addf %86, %91 : vector<8x128xf32>
    %93 = vector.extract_strided_slice %79 {offsets = [2, 0, 0], sizes = [1, 8, 32], strides = [1, 1, 1]} : vector<4x8x32xf32> to vector<1x8x32xf32>
    %94 = vector.shape_cast %93 : vector<1x8x32xf32> to vector<8x32xf32>
    %95 = arith.truncf %94 : vector<8x32xf32> to vector<8x32xbf16>
    %c64 = arith.constant 64 : index
    %c0_26 = arith.constant 0 : index
    %96 = vector.load %arg6[%c64, %c0_26] : memref<128x128xbf16, #tpu.memory_space<vmem>>, vector<32x128xbf16>
    %cst_27 = arith.constant dense<0.000000e+00> : vector<8x128xf32>
    %97 = tpu.matmul %95, %96, %cst_27 {dimension_numbers = #tpu.dot_dimension_numbers<[1], [0], [0], [1], [0, 0, 1, 1], [], []>} : vector<8x32xbf16>, vector<32x128xbf16>, vector<8x128xf32> -> vector<8x128xf32>
    %98 = arith.addf %92, %97 : vector<8x128xf32>
    %99 = vector.extract_strided_slice %79 {offsets = [3, 0, 0], sizes = [1, 8, 32], strides = [1, 1, 1]} : vector<4x8x32xf32> to vector<1x8x32xf32>
    %100 = vector.shape_cast %99 : vector<1x8x32xf32> to vector<8x32xf32>
    %101 = arith.truncf %100 : vector<8x32xf32> to vector<8x32xbf16>
    %c96 = arith.constant 96 : index
    %c0_28 = arith.constant 0 : index
    %102 = vector.load %arg6[%c96, %c0_28] : memref<128x128xbf16, #tpu.memory_space<vmem>>, vector<32x128xbf16>
    %cst_29 = arith.constant dense<0.000000e+00> : vector<8x128xf32>
    %103 = tpu.matmul %101, %102, %cst_29 {dimension_numbers = #tpu.dot_dimension_numbers<[1], [0], [0], [1], [0, 0, 1, 1], [], []>} : vector<8x32xbf16>, vector<32x128xbf16>, vector<8x128xf32> -> vector<8x128xf32>
    %104 = arith.addf %98, %103 : vector<8x128xf32>
    %c0_30 = arith.constant 0 : index
    %c0_31 = arith.constant 0 : index
    %105 = vector.load %arg7[%c0_30, %c0_31] : memref<1x128xf32, #tpu.memory_space<vmem>>, vector<1x128xf32>
    %106 = vector.broadcast %105 : vector<1x128xf32> to vector<8x128xf32>
    %107 = arith.addf %104, %106 : vector<8x128xf32>
    %108 = arith.addf %1, %107 : vector<8x128xf32>
    %c0_32 = arith.constant 0 : index
    %c0_33 = arith.constant 0 : index
    %109 = vector.load %arg8[%c0_32, %c0_33] : memref<1x128xf32, #tpu.memory_space<vmem>>, vector<1x128xf32>
    %c0_34 = arith.constant 0 : index
    %c0_35 = arith.constant 0 : index
    %110 = vector.load %arg9[%c0_34, %c0_35] : memref<1x128xf32, #tpu.memory_space<vmem>>, vector<1x128xf32>
    %cst_36 = arith.constant dense<0.000000e+00> : vector<8xf32>
    %111 = vector.multi_reduction <add>, %108, %cst_36 [1] : vector<8x128xf32> to vector<8xf32>
    %112 = vector.shape_cast %111 : vector<8xf32> to vector<8x1xf32>
    %cst_37 = arith.constant 1.280000e+02 : f32
    %113 = vector.broadcast %cst_37 : f32 to vector<8x1xf32>
    %114 = arith.divf %112, %113 : vector<8x1xf32>
    %115 = vector.broadcast %114 : vector<8x1xf32> to vector<8x128xf32>
    %116 = arith.subf %108, %115 : vector<8x128xf32>
    %117 = arith.mulf %116, %116 : vector<8x128xf32>
    %cst_38 = arith.constant dense<0.000000e+00> : vector<8xf32>
    %118 = vector.multi_reduction <add>, %117, %cst_38 [1] : vector<8x128xf32> to vector<8xf32>
    %119 = vector.shape_cast %118 : vector<8xf32> to vector<8x1xf32>
    %cst_39 = arith.constant 1.280000e+02 : f32
    %120 = vector.broadcast %cst_39 : f32 to vector<8x1xf32>
    %121 = arith.divf %119, %120 : vector<8x1xf32>
    %122 = vector.broadcast %114 : vector<8x1xf32> to vector<8x128xf32>
    %123 = arith.subf %108, %122 : vector<8x128xf32>
    %cst_40 = arith.constant 9.99999974E-6 : f32
    %124 = vector.broadcast %cst_40 : f32 to vector<8x1xf32>
    %125 = arith.addf %121, %124 : vector<8x1xf32>
    %126 = math.rsqrt %125 : vector<8x1xf32>
    %127 = vector.broadcast %126 : vector<8x1xf32> to vector<8x128xf32>
    %128 = arith.mulf %123, %127 : vector<8x128xf32>
    %129 = vector.broadcast %109 : vector<1x128xf32> to vector<8x128xf32>
    %130 = arith.mulf %128, %129 : vector<8x128xf32>
    %131 = vector.broadcast %110 : vector<1x128xf32> to vector<8x128xf32>
    %132 = arith.addf %130, %131 : vector<8x128xf32>
    %133 = arith.truncf %132 : vector<8x128xf32> to vector<8x128xbf16>
    %c0_41 = arith.constant 0 : index
    %c0_42 = arith.constant 0 : index
    %134 = vector.load %arg10[%c0_41, %c0_42] : memref<128x512xbf16, #tpu.memory_space<vmem>>, vector<128x512xbf16>
    %cst_43 = arith.constant dense<0.000000e+00> : vector<8x512xf32>
    %135 = tpu.matmul %133, %134, %cst_43 {dimension_numbers = #tpu.dot_dimension_numbers<[1], [0], [0], [1], [0, 0, 1, 1], [], []>} : vector<8x128xbf16>, vector<128x512xbf16>, vector<8x512xf32> -> vector<8x512xf32>
    %c0_44 = arith.constant 0 : index
    %c0_45 = arith.constant 0 : index
    %136 = vector.load %arg11[%c0_44, %c0_45] : memref<1x512xf32, #tpu.memory_space<vmem>>, vector<1x512xf32>
    %137 = vector.broadcast %136 : vector<1x512xf32> to vector<8x512xf32>
    %138 = arith.addf %135, %137 : vector<8x512xf32>
    %cst_46 = arith.constant 5.000000e-01 : f32
    %139 = vector.broadcast %cst_46 : f32 to vector<8x512xf32>
    %140 = arith.mulf %139, %138 : vector<8x512xf32>
    %cst_47 = arith.constant 4.471500e-02 : f32
    %141 = vector.broadcast %cst_47 : f32 to vector<8x512xf32>
    %142 = arith.mulf %141, %138 : vector<8x512xf32>
    %143 = arith.mulf %142, %138 : vector<8x512xf32>
    %144 = arith.mulf %143, %138 : vector<8x512xf32>
    %145 = arith.addf %138, %144 : vector<8x512xf32>
    %cst_48 = arith.constant 0.797884583 : f32
    %146 = vector.broadcast %cst_48 : f32 to vector<8x512xf32>
    %147 = arith.mulf %146, %145 : vector<8x512xf32>
    %148 = math.tanh %147 : vector<8x512xf32>
    %cst_49 = arith.constant 1.000000e+00 : f32
    %149 = vector.broadcast %cst_49 : f32 to vector<8x512xf32>
    %150 = arith.addf %149, %148 : vector<8x512xf32>
    %151 = arith.mulf %140, %150 : vector<8x512xf32>
    %152 = arith.truncf %151 : vector<8x512xf32> to vector<8x512xbf16>
    %c0_50 = arith.constant 0 : index
    %c0_51 = arith.constant 0 : index
    %153 = vector.load %arg12[%c0_50, %c0_51] : memref<512x128xbf16, #tpu.memory_space<vmem>>, vector<512x128xbf16>
    %cst_52 = arith.constant dense<0.000000e+00> : vector<8x128xf32>
    %154 = tpu.matmul %152, %153, %cst_52 {dimension_numbers = #tpu.dot_dimension_numbers<[1], [0], [0], [1], [0, 0, 1, 1], [], []>} : vector<8x512xbf16>, vector<512x128xbf16>, vector<8x128xf32> -> vector<8x128xf32>
    %c0_53 = arith.constant 0 : index
    %c0_54 = arith.constant 0 : index
    %155 = vector.load %arg13[%c0_53, %c0_54] : memref<1x128xf32, #tpu.memory_space<vmem>>, vector<1x128xf32>
    %156 = vector.broadcast %155 : vector<1x128xf32> to vector<8x128xf32>
    %157 = arith.addf %154, %156 : vector<8x128xf32>
    %158 = arith.addf %108, %157 : vector<8x128xf32>
    %c0_55 = arith.constant 0 : index
    %c0_56 = arith.constant 0 : index
    %c0_57 = arith.constant 0 : index
    %159 = vector.load %arg14[%c0_55, %c0_56, %c0_57] : memref<1x8x128xf32, #tpu.memory_space<vmem>>, vector<1x8x128xf32>
    %160 = vector.shape_cast %159 : vector<1x8x128xf32> to vector<8x128xf32>
    %161 = vector.shape_cast %158 : vector<8x128xf32> to vector<1x8x128xf32>
    tpu.vector_store %arg14[%c0_55, %c0_56, %c0_57], %161 {strides = array<i32>} : memref<1x8x128xf32, #tpu.memory_space<vmem>>, vector<1x8x128xf32>,
    return
  }
  func.func @transform_0(%arg0: i32) -> (i32, i32, i32) {
    %c0_i32 = arith.constant 0 : i32
    %c0_i32_0 = arith.constant 0 : i32
    %c0_i32_1 = arith.constant 0 : i32
    return %arg0, %c0_i32, %c0_i32_0 : i32, i32, i32
  }
  func.func @transform_1(%arg0: i32) -> (i32, i32) {
    %c0_i32 = arith.constant 0 : i32
    %c0_i32_0 = arith.constant 0 : i32
    %c0_i32_1 = arith.constant 0 : i32
    return %c0_i32, %c0_i32_0 : i32, i32
  }
  func.func @transform_2(%arg0: i32) -> (i32, i32) {
    %c0_i32 = arith.constant 0 : i32
    %c0_i32_0 = arith.constant 0 : i32
    %c0_i32_1 = arith.constant 0 : i32
    return %c0_i32, %c0_i32_0 : i32, i32
  }
  func.func @transform_3(%arg0: i32) -> (i32, i32) {
    %c0_i32 = arith.constant 0 : i32
    %c0_i32_0 = arith.constant 0 : i32
    %c0_i32_1 = arith.constant 0 : i32
    return %c0_i32, %c0_i32_0 : i32, i32
  }
  func.func @transform_4(%arg0: i32) -> (i32, i32) {
    %c0_i32 = arith.constant 0 : i32
    %c0_i32_0 = arith.constant 0 : i32
    %c0_i32_1 = arith.constant 0 : i32
    return %c0_i32, %c0_i32_0 : i32, i32
  }
  func.func @transform_5(%arg0: i32) -> (i32, i32) {
    %c0_i32 = arith.constant 0 : i32
    %c0_i32_0 = arith.constant 0 : i32
    %c0_i32_1 = arith.constant 0 : i32
    return %c0_i32, %c0_i32_0 : i32, i32
  }
  func.func @transform_6(%arg0: i32) -> (i32, i32) {
    %c0_i32 = arith.constant 0 : i32
    %c0_i32_0 = arith.constant 0 : i32
    %c0_i32_1 = arith.constant 0 : i32
    return %c0_i32, %c0_i32_0 : i32, i32
  }
  func.func @transform_7(%arg0: i32) -> (i32, i32) {
    %c0_i32 = arith.constant 0 : i32
    %c0_i32_0 = arith.constant 0 : i32
    %c0_i32_1 = arith.constant 0 : i32
    return %c0_i32, %c0_i32_0 : i32, i32
  }
  func.func @transform_8(%arg0: i32) -> (i32, i32) {
    %c0_i32 = arith.constant 0 : i32
    %c0_i32_0 = arith.constant 0 : i32
    %c0_i32_1 = arith.constant 0 : i32
    return %c0_i32, %c0_i32_0 : i32, i32
  }
  func.func @transform_9(%arg0: i32) -> (i32, i32) {
    %c0_i32 = arith.constant 0 : i32
    %c0_i32_0 = arith.constant 0 : i32
    %c0_i32_1 = arith.constant 0 : i32
    return %c0_i32, %c0_i32_0 : i32, i32
  }
  func.func @transform_10(%arg0: i32) -> (i32, i32) {
    %c0_i32 = arith.constant 0 : i32
    %c0_i32_0 = arith.constant 0 : i32
    %c0_i32_1 = arith.constant 0 : i32
    return %c0_i32, %c0_i32_0 : i32, i32
  }
  func.func @transform_11(%arg0: i32) -> (i32, i32) {
    %c0_i32 = arith.constant 0 : i32
    %c0_i32_0 = arith.constant 0 : i32
    %c0_i32_1 = arith.constant 0 : i32
    return %c0_i32, %c0_i32_0 : i32, i32
  }
  func.func @transform_12(%arg0: i32) -> (i32, i32) {
    %c0_i32 = arith.constant 0 : i32
    %c0_i32_0 = arith.constant 0 : i32
    %c0_i32_1 = arith.constant 0 : i32
    return %c0_i32, %c0_i32_0 : i32, i32
  }
  func.func @transform_13(%arg0: i32) -> (i32, i32, i32) {
    %c0_i32 = arith.constant 0 : i32
    %c0_i32_0 = arith.constant 0 : i32
    %c0_i32_1 = arith.constant 0 : i32
    return %arg0, %c0_i32, %c0_i32_0 : i32, i32, i32
  }
}

</mosaic_0001>

<llo_original>
// kernel: peft_transformer_forward.2
$region0: #{peft_transformer_forward.2}
  #allocation0 [shape = 'u32[]', space=smem, size = 0x4, offset = 0x4, fixed_abs, tag = 'smem constant byte address 0x4 - core index']
  #allocation1 [shape = 'u32[144,128]{1,0:T(1,128)}', space=vmem, size = 0x12000, scoped, tag = 'internal scratch']
  %s0 = inlined_call_operand.vmem [shape: f32[2,8,128], index: 0, kind: input, shape index: {}]
  %s1 = inlined_call_operand.vmem [shape: f32[1,128], index: 1, kind: input, shape index: {}]
  %s2 = inlined_call_operand.vmem [shape: f32[1,128], index: 2, kind: input, shape index: {}]
  %s3 = inlined_call_operand.vmem [shape: bf16[128,384], index: 3, kind: input, shape index: {}]
  %s4 = inlined_call_operand.vmem [shape: f32[1,384], index: 4, kind: input, shape index: {}]
  %s5 = inlined_call_operand.vmem [shape: bf16[128,128], index: 5, kind: input, shape index: {}]
  %s6 = inlined_call_operand.vmem [shape: f32[1,128], index: 6, kind: input, shape index: {}]
  %s7 = inlined_call_operand.vmem [shape: f32[1,128], index: 7, kind: input, shape index: {}]
  %s8 = inlined_call_operand.vmem [shape: f32[1,128], index: 8, kind: input, shape index: {}]
  %s9 = inlined_call_operand.vmem [shape: bf16[128,512], index: 9, kind: input, shape index: {}]
  %s10 = inlined_call_operand.vmem [shape: f32[1,512], index: 10, kind: input, shape index: {}]
  %s11 = inlined_call_operand.vmem [shape: bf16[512,128], index: 11, kind: input, shape index: {}]
  %s12 = inlined_call_operand.vmem [shape: f32[1,128], index: 12, kind: input, shape index: {}]
  %s13 = inlined_call_operand.vmem [shape: f32[2,8,128], index: 13, kind: output, shape index: {}]
  %s14 = sld [smem:[#allocation0]]
  $region85: #{peft_transformer_forward.2} parent=0
    _
  %s16 = ssub.s32 1, %s14
  %s17 = scalar_select 0, %s16, %s14
  loop: start=0, step=1, limit=4
  $region2: #{peft_transformer_forward.2} parent=0 // loop_pre_header
    _
  $region3: #{peft_transformer_forward.2} parent=0 // loop_header
    %s19 = sphi 0, %s23
    %p20 = scmp.ge.s32.totalorder %s19, 4
    %s29 = sphi 0, %s31
    %s32 = sphi 0, %s29
    %s33 = sphi 0, %s32
    %s49 = sphi 0, %s33
    %s53 = sphi 0, %s53
    %s55 = sphi 0, %s53
    %s56 = sphi 0, %s55
    %s70 = sphi 0, %s56
    %s74 = sphi 0, %s74
    %s76 = sphi 0, %s74
    %s77 = sphi 0, %s76
    %s91 = sphi 0, %s77
    %s95 = sphi 0, %s95
    %s97 = sphi 0, %s95
    %s98 = sphi 0, %s97
    %s112 = sphi 0, %s98
    %s116 = sphi 0, %s116
    %s118 = sphi 0, %s116
    %s119 = sphi 0, %s118
    %s133 = sphi 0, %s119
    %s137 = sphi 0, %s137
    %s139 = sphi 0, %s137
    %s140 = sphi 0, %s139
    %s154 = sphi 0, %s140
    %s158 = sphi 0, %s158
    %s160 = sphi 0, %s158
    %s161 = sphi 0, %s160
    %s175 = sphi 0, %s161
    %s179 = sphi 0, %s179
    %s181 = sphi 0, %s179
    %s182 = sphi 0, %s181
    %s196 = sphi 0, %s182
    %s200 = sphi 0, %s200
    %s202 = sphi 0, %s200
    %s203 = sphi 0, %s202
    %s217 = sphi 0, %s203
    %s221 = sphi 0, %s221
    %s223 = sphi 0, %s221
    %s224 = sphi 0, %s223
    %s238 = sphi 0, %s224
    %s242 = sphi 0, %s242
    %s244 = sphi 0, %s242
    %s245 = sphi 0, %s244
    %s259 = sphi 0, %s245
    %s263 = sphi 0, %s263
    %s265 = sphi 0, %s263
    %s266 = sphi 0, %s265
    %s280 = sphi 0, %s266
    %s284 = sphi 0, %s284
    %s286 = sphi 0, %s284
    %s287 = sphi 0, %s286
    %s301 = sphi 0, %s287
    %s307 = sphi 0, %s309
    %s310 = sphi 0, %s307
    %s311 = sphi 0, %s310
    %s327 = sphi 0, %s311
  $region4: #{peft_transformer_forward.2} parent=0 // loop_header_branch
    %22 = sbr.rel (%p20) target = $region8
  $region5: #{peft_transformer_forward.2} parent=0 // loop_body
    %s24 = ssub.s32 %s19, 1
    %s25 = ssub.s32 %s19, 2
    %s26 = sadd.s32 %s19, 1
    %s27 = ssub.s32 %s19, %s26
    %p28 = scmp.eq.s32.totalorder %s27, 0
    %s30 = sadd.s32 %s29, 1
    %s31 = scalar_select %p28, %s29, %s30
    %p34 = pneg %p28
    %p35 = scmp.eq.s32.totalorder %s19, 1
    %p36 = por %p34, %p35
    %p37 = scmp.ne.s32.totalorder %s29, %s32
    %p38 = scmp.eq.s32.totalorder %s19, 0
    %p39 = por %p37, %p38
    %p40 = scmp.ne.s32.totalorder %s29, %s32
    %p41 = scmp.eq.s32.totalorder %s24, 1
    %p42 = por %p40, %p41
    %p43 = scmp.ne.s32.totalorder %s32, %s33
    %p44 = scmp.eq.s32.totalorder %s24, 0
    %p45 = por %p43, %p44
    %p46 = scmp.ne.s32.totalorder %s32, %s33
    %p47 = scmp.eq.s32.totalorder %s25, 1
    %p48 = por %p46, %p47
    %p50 = scmp.ne.s32.totalorder %s33, %s49
    %p51 = scmp.eq.s32.totalorder %s25, 0
    %p52 = por %p50, %p51
    %s54 = sadd.s32 %s53, 1
    %p57 = scmp.eq.s32.totalorder %s19, 1
    %p58 = scmp.ne.s32.totalorder %s53, %s55
    %p59 = scmp.eq.s32.totalorder %s19, 0
    %p60 = por %p58, %p59
    %p61 = scmp.ne.s32.totalorder %s53, %s55
    %p62 = scmp.eq.s32.totalorder %s24, 1
    %p63 = por %p61, %p62
    %p64 = scmp.ne.s32.totalorder %s55, %s56
    %p65 = scmp.eq.s32.totalorder %s24, 0
    %p66 = por %p64, %p65
    %p67 = scmp.ne.s32.totalorder %s55, %s56
    %p68 = scmp.eq.s32.totalorder %s25, 1
    %p69 = por %p67, %p68
    %p71 = scmp.ne.s32.totalorder %s56, %s70
    %p72 = scmp.eq.s32.totalorder %s25, 0
    %p73 = por %p71, %p72
    %s75 = sadd.s32 %s74, 1
    %p78 = scmp.eq.s32.totalorder %s19, 1
    %p79 = scmp.ne.s32.totalorder %s74, %s76
    %p80 = scmp.eq.s32.totalorder %s19, 0
    %p81 = por %p79, %p80
    %p82 = scmp.ne.s32.totalorder %s74, %s76
    %p83 = scmp.eq.s32.totalorder %s24, 1
    %p84 = por %p82, %p83
    %p85 = scmp.ne.s32.totalorder %s76, %s77
    %p86 = scmp.eq.s32.totalorder %s24, 0
    %p87 = por %p85, %p86
    %p88 = scmp.ne.s32.totalorder %s76, %s77
    %p89 = scmp.eq.s32.totalorder %s25, 1
    %p90 = por %p88, %p89
    %p92 = scmp.ne.s32.totalorder %s77, %s91
    %p93 = scmp.eq.s32.totalorder %s25, 0
    %p94 = por %p92, %p93
    %s96 = sadd.s32 %s95, 1
    %p99 = scmp.eq.s32.totalorder %s19, 1
    %p100 = scmp.ne.s32.totalorder %s95, %s97
    %p101 = scmp.eq.s32.totalorder %s19, 0
    %p102 = por %p100, %p101
    %p103 = scmp.ne.s32.totalorder %s95, %s97
    %p104 = scmp.eq.s32.totalorder %s24, 1
    %p105 = por %p103, %p104
    %p106 = scmp.ne.s32.totalorder %s97, %s98
    %p107 = scmp.eq.s32.totalorder %s24, 0
    %p108 = por %p106, %p107
    %p109 = scmp.ne.s32.totalorder %s97, %s98
    %p110 = scmp.eq.s32.totalorder %s25, 1
    %p111 = por %p109, %p110
    %p113 = scmp.ne.s32.totalorder %s98, %s112
    %p114 = scmp.eq.s32.totalorder %s25, 0
    %p115 = por %p113, %p114
    %s117 = sadd.s32 %s116, 1
    %p120 = scmp.eq.s32.totalorder %s19, 1
    %p121 = scmp.ne.s32.totalorder %s116, %s118
    %p122 = scmp.eq.s32.totalorder %s19, 0
    %p123 = por %p121, %p122
    %p124 = scmp.ne.s32.totalorder %s116, %s118
    %p125 = scmp.eq.s32.totalorder %s24, 1
    %p126 = por %p124, %p125
    %p127 = scmp.ne.s32.totalorder %s118, %s119
    %p128 = scmp.eq.s32.totalorder %s24, 0
    %p129 = por %p127, %p128
    %p130 = scmp.ne.s32.totalorder %s118, %s119
    %p131 = scmp.eq.s32.totalorder %s25, 1
    %p132 = por %p130, %p131
    %p134 = scmp.ne.s32.totalorder %s119, %s133
    %p135 = scmp.eq.s32.totalorder %s25, 0
    %p136 = por %p134, %p135
    %s138 = sadd.s32 %s137, 1
    %p141 = scmp.eq.s32.totalorder %s19, 1
    %p142 = scmp.ne.s32.totalorder %s137, %s139
    %p143 = scmp.eq.s32.totalorder %s19, 0
    %p144 = por %p142, %p143
    %p145 = scmp.ne.s32.totalorder %s137, %s139
    %p146 = scmp.eq.s32.totalorder %s24, 1
    %p147 = por %p145, %p146
    %p148 = scmp.ne.s32.totalorder %s139, %s140
    %p149 = scmp.eq.s32.totalorder %s24, 0
    %p150 = por %p148, %p149
    %p151 = scmp.ne.s32.totalorder %s139, %s140
    %p152 = scmp.eq.s32.totalorder %s25, 1
    %p153 = por %p151, %p152
    %p155 = scmp.ne.s32.totalorder %s140, %s154
    %p156 = scmp.eq.s32.totalorder %s25, 0
    %p157 = por %p155, %p156
    %s159 = sadd.s32 %s158, 1
    %p162 = scmp.eq.s32.totalorder %s19, 1
    %p163 = scmp.ne.s32.totalorder %s158, %s160
    %p164 = scmp.eq.s32.totalorder %s19, 0
    %p165 = por %p163, %p164
    %p166 = scmp.ne.s32.totalorder %s158, %s160
    %p167 = scmp.eq.s32.totalorder %s24, 1
    %p168 = por %p166, %p167
    %p169 = scmp.ne.s32.totalorder %s160, %s161
    %p170 = scmp.eq.s32.totalorder %s24, 0
    %p171 = por %p169, %p170
    %p172 = scmp.ne.s32.totalorder %s160, %s161
    %p173 = scmp.eq.s32.totalorder %s25, 1
    %p174 = por %p172, %p173
    %p176 = scmp.ne.s32.totalorder %s161, %s175
    %p177 = scmp.eq.s32.totalorder %s25, 0
    %p178 = por %p176, %p177
    %s180 = sadd.s32 %s179, 1
    %p183 = scmp.eq.s32.totalorder %s19, 1
    %p184 = scmp.ne.s32.totalorder %s179, %s181
    %p185 = scmp.eq.s32.totalorder %s19, 0
    %p186 = por %p184, %p185
    %p187 = scmp.ne.s32.totalorder %s179, %s181
    %p188 = scmp.eq.s32.totalorder %s24, 1
    %p189 = por %p187, %p188
    %p190 = scmp.ne.s32.totalorder %s181, %s182
    %p191 = scmp.eq.s32.totalorder %s24, 0
    %p192 = por %p190, %p191
    %p193 = scmp.ne.s32.totalorder %s181, %s182
    %p194 = scmp.eq.s32.totalorder %s25, 1
    %p195 = por %p193, %p194
    %p197 = scmp.ne.s32.totalorder %s182, %s196
    %p198 = scmp.eq.s32.totalorder %s25, 0
    %p199 = por %p197, %p198
    %s201 = sadd.s32 %s200, 1
    %p204 = scmp.eq.s32.totalorder %s19, 1
    %p205 = scmp.ne.s32.totalorder %s200, %s202
    %p206 = scmp.eq.s32.totalorder %s19, 0
    %p207 = por %p205, %p206
    %p208 = scmp.ne.s32.totalorder %s200, %s202
    %p209 = scmp.eq.s32.totalorder %s24, 1
    %p210 = por %p208, %p209
    %p211 = scmp.ne.s32.totalorder %s202, %s203
    %p212 = scmp.eq.s32.totalorder %s24, 0
    %p213 = por %p211, %p212
    %p214 = scmp.ne.s32.totalorder %s202, %s203
    %p215 = scmp.eq.s32.totalorder %s25, 1
    %p216 = por %p214, %p215
    %p218 = scmp.ne.s32.totalorder %s203, %s217
    %p219 = scmp.eq.s32.totalorder %s25, 0
    %p220 = por %p218, %p219
    %s222 = sadd.s32 %s221, 1
    %p225 = scmp.eq.s32.totalorder %s19, 1
    %p226 = scmp.ne.s32.totalorder %s221, %s223
    %p227 = scmp.eq.s32.totalorder %s19, 0
    %p228 = por %p226, %p227
    %p229 = scmp.ne.s32.totalorder %s221, %s223
    %p230 = scmp.eq.s32.totalorder %s24, 1
    %p231 = por %p229, %p230
    %p232 = scmp.ne.s32.totalorder %s223, %s224
    %p233 = scmp.eq.s32.totalorder %s24, 0
    %p234 = por %p232, %p233
    %p235 = scmp.ne.s32.totalorder %s223, %s224
    %p236 = scmp.eq.s32.totalorder %s25, 1
    %p237 = por %p235, %p236
    %p239 = scmp.ne.s32.totalorder %s224, %s238
    %p240 = scmp.eq.s32.totalorder %s25, 0
    %p241 = por %p239, %p240
    %s243 = sadd.s32 %s242, 1
    %p246 = scmp.eq.s32.totalorder %s19, 1
    %p247 = scmp.ne.s32.totalorder %s242, %s244
    %p248 = scmp.eq.s32.totalorder %s19, 0
    %p249 = por %p247, %p248
    %p250 = scmp.ne.s32.totalorder %s242, %s244
    %p251 = scmp.eq.s32.totalorder %s24, 1
    %p252 = por %p250, %p251
    %p253 = scmp.ne.s32.totalorder %s244, %s245
    %p254 = scmp.eq.s32.totalorder %s24, 0
    %p255 = por %p253, %p254
    %p256 = scmp.ne.s32.totalorder %s244, %s245
    %p257 = scmp.eq.s32.totalorder %s25, 1
    %p258 = por %p256, %p257
    %p260 = scmp.ne.s32.totalorder %s245, %s259
    %p261 = scmp.eq.s32.totalorder %s25, 0
    %p262 = por %p260, %p261
    %s264 = sadd.s32 %s263, 1
    %p267 = scmp.eq.s32.totalorder %s19, 1
    %p268 = scmp.ne.s32.totalorder %s263, %s265
    %p269 = scmp.eq.s32.totalorder %s19, 0
    %p270 = por %p268, %p269
    %p271 = scmp.ne.s32.totalorder %s263, %s265
    %p272 = scmp.eq.s32.totalorder %s24, 1
    %p273 = por %p271, %p272
    %p274 = scmp.ne.s32.totalorder %s265, %s266
    %p275 = scmp.eq.s32.totalorder %s24, 0
    %p276 = por %p274, %p275
    %p277 = scmp.ne.s32.totalorder %s265, %s266
    %p278 = scmp.eq.s32.totalorder %s25, 1
    %p279 = por %p277, %p278
    %p281 = scmp.ne.s32.totalorder %s266, %s280
    %p282 = scmp.eq.s32.totalorder %s25, 0
    %p283 = por %p281, %p282
    %s285 = sadd.s32 %s284, 1
    %p288 = scmp.eq.s32.totalorder %s19, 1
    %p289 = scmp.ne.s32.totalorder %s284, %s286
    %p290 = scmp.eq.s32.totalorder %s19, 0
    %p291 = por %p289, %p290
    %p292 = scmp.ne.s32.totalorder %s284, %s286
    %p293 = scmp.eq.s32.totalorder %s24, 1
    %p294 = por %p292, %p293
    %p295 = scmp.ne.s32.totalorder %s286, %s287
    %p296 = scmp.eq.s32.totalorder %s24, 0
    %p297 = por %p295, %p296
    %p298 = scmp.ne.s32.totalorder %s286, %s287
    %p299 = scmp.eq.s32.totalorder %s25, 1
    %p300 = por %p298, %p299
    %p302 = scmp.ne.s32.totalorder %s287, %s301
    %p303 = scmp.eq.s32.totalorder %s25, 0
    %p304 = por %p302, %p303
    %s305 = ssub.s32 %s19, %s26
    %p306 = scmp.eq.s32.totalorder %s305, 0
    %s308 = sadd.s32 %s307, 1
    %s309 = scalar_select %p306, %s307, %s308
    %p312 = pneg %p306
    %p313 = scmp.eq.s32.totalorder %s19, 1
    %p314 = por %p312, %p313
    %p315 = scmp.ne.s32.totalorder %s307, %s310
    %p316 = scmp.eq.s32.totalorder %s19, 0
    %p317 = por %p315, %p316
    %p318 = scmp.ne.s32.totalorder %s307, %s310
    %p319 = scmp.eq.s32.totalorder %s24, 1
    %p320 = por %p318, %p319
    %p321 = scmp.ne.s32.totalorder %s310, %s311
    %p322 = scmp.eq.s32.totalorder %s24, 0
    %p323 = por %p321, %p322
    %p324 = scmp.ne.s32.totalorder %s310, %s311
    %p325 = scmp.eq.s32.totalorder %s25, 1
    %p326 = por %p324, %p325
    %p328 = scmp.ne.s32.totalorder %s311, %s327
    %p329 = scmp.eq.s32.totalorder %s25, 0
    %p330 = por %p328, %p329
    %p331 = scmp.le.s32.totalorder 1, %s19
    %p332 = scmp.lt.s32.totalorder %s19, 3
    %p333 = pnand %p331, %p332
    %p334 = pneg %p333
    // Predicated region
    $region9: #{peft_transformer_forward.2} parent=5 // pred_check
      _
    $region10: #{peft_transformer_forward.2} parent=5 // pred_check_branch
      %336 = sbr.rel (%p333) target = $region12
    $region11: #{peft_transformer_forward.2} parent=5 // pred_region
      %s337 = ssub.s32 %s19, 1
      // Predicated region
      $region13: #{peft_transformer_forward.2} parent=11 // pred_check
        %p338 = pneg %p66
      $region14: #{peft_transformer_forward.2} parent=11 // pred_check_branch
        %340 = sbr.rel (%p338) target = $region16
      $region15: #{peft_transformer_forward.2} parent=11 // pred_region
        _
      $region16: #{peft_transformer_forward.2} parent=11 // pred_fallthru
        _
      // Predicated region
      $region17: #{peft_transformer_forward.2} parent=11 // pred_check
        %p341 = pneg %p87
      $region18: #{peft_transformer_forward.2} parent=11 // pred_check_branch
        %343 = sbr.rel (%p341) target = $region20
      $region19: #{peft_transformer_forward.2} parent=11 // pred_region
        _
      $region20: #{peft_transformer_forward.2} parent=11 // pred_fallthru
        _
      // Predicated region
      $region21: #{peft_transformer_forward.2} parent=11 // pred_check
        %p344 = pneg %p108
      $region22: #{peft_transformer_forward.2} parent=11 // pred_check_branch
        %346 = sbr.rel (%p344) target = $region24
      $region23: #{peft_transformer_forward.2} parent=11 // pred_region
        _
      $region24: #{peft_transformer_forward.2} parent=11 // pred_fallthru
        _
      // Predicated region
      $region25: #{peft_transformer_forward.2} parent=11 // pred_check
        %p347 = pneg %p129
      $region26: #{peft_transformer_forward.2} parent=11 // pred_check_branch
        %349 = sbr.rel (%p347) target = $region28
      $region27: #{peft_transformer_forward.2} parent=11 // pred_region
        _
      $region28: #{peft_transformer_forward.2} parent=11 // pred_fallthru
        _
      // Predicated region
      $region29: #{peft_transformer_forward.2} parent=11 // pred_check
        %p350 = pneg %p150
      $region30: #{peft_transformer_forward.2} parent=11 // pred_check_branch
        %352 = sbr.rel (%p350) target = $region32
      $region31: #{peft_transformer_forward.2} parent=11 // pred_region
        _
      $region32: #{peft_transformer_forward.2} parent=11 // pred_fallthru
        _
      // Predicated region
      $region33: #{peft_transformer_forward.2} parent=11 // pred_check
        %p353 = pneg %p171
      $region34: #{peft_transformer_forward.2} parent=11 // pred_check_branch
        %355 = sbr.rel (%p353) target = $region36
      $region35: #{peft_transformer_forward.2} parent=11 // pred_region
        _
      $region36: #{peft_transformer_forward.2} parent=11 // pred_fallthru
        _
      // Predicated region
      $region37: #{peft_transformer_forward.2} parent=11 // pred_check
        %p356 = pneg %p192
      $region38: #{peft_transformer_forward.2} parent=11 // pred_check_branch
        %358 = sbr.rel (%p356) target = $region40
      $region39: #{peft_transformer_forward.2} parent=11 // pred_region
        _
      $region40: #{peft_transformer_forward.2} parent=11 // pred_fallthru
        _
      // Predicated region
      $region41: #{peft_transformer_forward.2} parent=11 // pred_check
        %p359 = pneg %p213
      $region42: #{peft_transformer_forward.2} parent=11 // pred_check_branch
        %361 = sbr.rel (%p359) target = $region44
      $region43: #{peft_transformer_forward.2} parent=11 // pred_region
        _
      $region44: #{peft_transformer_forward.2} parent=11 // pred_fallthru
        _
      // Predicated region
      $region45: #{peft_transformer_forward.2} parent=11 // pred_check
        %p362 = pneg %p234
      $region46: #{peft_transformer_forward.2} parent=11 // pred_check_branch
        %364 = sbr.rel (%p362) target = $region48
      $region47: #{peft_transformer_forward.2} parent=11 // pred_region
        _
      $region48: #{peft_transformer_forward.2} parent=11 // pred_fallthru
        _
      // Predicated region
      $region49: #{peft_transformer_forward.2} parent=11 // pred_check
        %p365 = pneg %p255
      $region50: #{peft_transformer_forward.2} parent=11 // pred_check_branch
        %367 = sbr.rel (%p365) target = $region52
      $region51: #{peft_transformer_forward.2} parent=11 // pred_region
        _
      $region52: #{peft_transformer_forward.2} parent=11 // pred_fallthru
        _
      // Predicated region
      $region53: #{peft_transformer_forward.2} parent=11 // pred_check
        %p368 = pneg %p276
      $region54: #{peft_transformer_forward.2} parent=11 // pred_check_branch
        %370 = sbr.rel (%p368) target = $region56
      $region55: #{peft_transformer_forward.2} parent=11 // pred_region
        _
      $region56: #{peft_transformer_forward.2} parent=11 // pred_fallthru
        _
      // Predicated region
      $region57: #{peft_transformer_forward.2} parent=11 // pred_check
        %p371 = pneg %p297
      $region58: #{peft_transformer_forward.2} parent=11 // pred_check_branch
        %373 = sbr.rel (%p371) target = $region60
      $region59: #{peft_transformer_forward.2} parent=11 // pred_region
        _
      $region60: #{peft_transformer_forward.2} parent=11 // pred_fallthru
        _
    $region12: #{peft_transformer_forward.2} parent=5 // pred_fallthru
      _
    %p374 = scmp.lt.s32.totalorder %s19, 2
    // Predicated region
    $region61: #{peft_transformer_forward.2} parent=5 // pred_check
      %p375 = pneg %p374
    $region62: #{peft_transformer_forward.2} parent=5 // pred_check_branch
      %377 = sbr.rel (%p375) target = $region64
    $region63: #{peft_transformer_forward.2} parent=5 // pred_region
      // Predicated region
      $region65: #{peft_transformer_forward.2} parent=63 // pred_check
        %p378 = pneg %p39
      $region66: #{peft_transformer_forward.2} parent=63 // pred_check_branch
        %380 = sbr.rel (%p378) target = $region68
      $region67: #{peft_transformer_forward.2} parent=63 // pred_region
        %p381 = scmp.lt.s32.totalorder %s19, 1
        %s382 = scalar_select %p381, %s19, 1
        %s383 = smul.addr %s382, 8
        %s384 = scalar_lea.vmem %s0, %s383
      $region68: #{peft_transformer_forward.2} parent=63 // pred_fallthru
        _
    $region64: #{peft_transformer_forward.2} parent=5 // pred_fallthru
      _
    %p385 = scmp.le.s32.totalorder 1, %s19
    %p386 = scmp.lt.s32.totalorder %s19, 3
    %p387 = pnand %p385, %p386
    %p388 = pneg %p387
    // Predicated region
    $region69: #{peft_transformer_forward.2} parent=5 // pred_check
      _
    $region70: #{peft_transformer_forward.2} parent=5 // pred_check_branch
      %390 = sbr.rel (%p387) target = $region72
    $region71: #{peft_transformer_forward.2} parent=5 // pred_region
      %s391 = ssub.s32 %s19, 1
      %p392 = scmp.lt.s32.totalorder %s24, 1
      %s393 = scalar_select %p392, %s24, 1
      %s394 = smul.addr %s393, 8
      %s395 = scalar_lea.vmem %s0, %s394
      %p396 = pneg %p45
      %p397 = pneg %p42
      %p398 = pneg %p66
      %p399 = pneg %p63
      %p400 = pneg %p87
      %p401 = pneg %p84
      %p402 = pneg %p108
      %p403 = pneg %p105
      %p404 = pneg %p129
      %p405 = pneg %p126
      %p406 = pneg %p150
      %p407 = pneg %p147
      %p408 = pneg %p171
      %p409 = pneg %p168
      %p410 = pneg %p192
      %p411 = pneg %p189
      %p412 = pneg %p213
      %p413 = pneg %p210
      %p414 = pneg %p234
      %p415 = pneg %p231
      %p416 = pneg %p255
      %p417 = pneg %p252
      %p418 = pneg %p276
      %p419 = pneg %p273
      %p420 = pneg %p297
      %p421 = pneg %p294
      %p422 = pneg %p323
      %p423 = pneg %p320
      %p424 = scmp.lt.s32.totalorder %s24, 1
      %s425 = scalar_select %p424, %s24, 1
      %s426 = smul.addr %s425, 8
      %s427 = scalar_lea.vmem %s13, %s426
      %p428 = scmp.lt.s32.totalorder %s24, 1
      %s429 = scalar_select %p428, %s24, 1
      %s430 = smul.addr %s429, 8
      %s431 = scalar_lea.vmem %s0, %s430
      %p432 = scmp.lt.s32.totalorder %s24, 1
      %s433 = scalar_select %p432, %s24, 1
      %s434 = smul.addr %s433, 8
      %s435 = scalar_lea.vmem %s13, %s434
      %v437 = vld [vmem:[%s431] sm:$0xff]
      %v438 = vld [vmem:[%s1] sm:$0x1]
      %v439 = vld [vmem:[%s2] sm:$0x1]
      %440 = vadd.xlane.f32.xlu0 %v437
      %v441 = vpop.xlane.xlu0 %440
      %v442 = vrcp.pop 128.0
      %v443 = vmul.f32 %v441, %v442
      %v444 = vsub.f32 %v437, %v443
      %v445 = vmul.f32 %v444, %v444
      %446 = vadd.xlane.f32.xlu0 %v445
      %v447 = vpop.xlane.xlu0 %446
      %v448 = vmul.f32 %v447, %v442
      %v449 = vadd.f32 %v448, 1e-05
      %v450 = vrsqrt.pop %v449
      %v451 = vmul.f32 %v444, %v450
      %v453 = vlaneseq
      %v454 = vshrl.u32 %v453, 7
      %v455 = vsub.s32 0, %v454
      %v456 = vrot.slane %v438, %v455
      %v458 = vmul.f32 %v451, %v456
      %v460 = vlaneseq
      %v461 = vshrl.u32 %v460, 7
      %v462 = vsub.s32 0, %v461
      %v463 = vrot.slane %v439, %v462
      %v465 = vadd.f32 %v458, %v463
      %v466 = vpack.c.bf16 %v465, %v465
      %v467 = vld [vmem:[%s3] sm:$0xff]
      %v468 = vld [vmem:[%s3 + $0x8] sm:$0xf]
      %v469 = vld [vmem:[%s3 + $0xc] sm:$0xff]
      %v470 = vld [vmem:[%s3 + $0x14] sm:$0xf]
      %v471 = vld [vmem:[%s3 + $0x18] sm:$0xff]
      %v472 = vld [vmem:[%s3 + $0x20] sm:$0xf]
      %v473 = vld [vmem:[%s3 + $0x24] sm:$0xff]
      %v474 = vld [vmem:[%s3 + $0x2c] sm:$0xf]
      %v475 = vld [vmem:[%s3 + $0x30] sm:$0xff]
      %v476 = vld [vmem:[%s3 + $0x38] sm:$0xf]
      %v477 = vld [vmem:[%s3 + $0x3c] sm:$0xff]
      %v478 = vld [vmem:[%s3 + $0x44] sm:$0xf]
      %v479 = vld [vmem:[%s3 + $0x48] sm:$0xff]
      %v480 = vld [vmem:[%s3 + $0x50] sm:$0xf]
      %v481 = vld [vmem:[%s3 + $0x54] sm:$0xff]
      %v482 = vld [vmem:[%s3 + $0x5c] sm:$0xf]
      %v483 = vld [vmem:[%s3 + $0x60] sm:$0xff]
      %v484 = vld [vmem:[%s3 + $0x68] sm:$0xf]
      %v485 = vld [vmem:[%s3 + $0x6c] sm:$0xff]
      %v486 = vld [vmem:[%s3 + $0x74] sm:$0xf]
      %v487 = vld [vmem:[%s3 + $0x78] sm:$0xff]
      %v488 = vld [vmem:[%s3 + $0x80] sm:$0xf]
      %v489 = vld [vmem:[%s3 + $0x84] sm:$0xff]
      %v490 = vld [vmem:[%s3 + $0x8c] sm:$0xf]
      %v491 = vld [vmem:[%s3 + $0x90] sm:$0xff]
      %v492 = vld [vmem:[%s3 + $0x98] sm:$0xf]
      %v493 = vld [vmem:[%s3 + $0x9c] sm:$0xff]
      %v494 = vld [vmem:[%s3 + $0xa4] sm:$0xf]
      %v495 = vld [vmem:[%s3 + $0xa8] sm:$0xff]
      %v496 = vld [vmem:[%s3 + $0xb0] sm:$0xf]
      %v497 = vld [vmem:[%s3 + $0xb4] sm:$0xff]
      %v498 = vld [vmem:[%s3 + $0xbc] sm:$0xf]
      %v499 = vld [vmem:[%s4] sm:$0x7]
      %v501 = vlaneseq
      %v502 = vshrl.u32 %v501, 7
      %v503 = vsub.s32 0, %v502
      %v504 = vrot.slane %v499, %v503
      %v505 = vlaneseq
      %v506 = vshrl.u32 %v505, 7
      %v507 = vsub.s32 1, %v506
      %v508 = vrot.slane %v499, %v507
      %v509 = vlaneseq
      %v510 = vshrl.u32 %v509, 7
      %v511 = vsub.s32 2, %v510
      %v512 = vrot.slane %v499, %v511
      %v548 = vunpack.c.l.b16 %v467
      %v549 = vunpack.c.h.b16 %v467
      %v550 = vunpack.c.l.b16 %v468
      %v551 = vunpack.c.l.b16 %v469
      %v552 = vunpack.c.h.b16 %v469
      %v553 = vunpack.c.l.b16 %v470
      %v554 = vunpack.c.l.b16 %v471
      %v555 = vunpack.c.h.b16 %v471
      %v556 = vunpack.c.l.b16 %v472
      %v557 = vunpack.c.l.b16 %v473
      %v558 = vunpack.c.h.b16 %v473
      %v559 = vunpack.c.l.b16 %v474
      %v560 = vunpack.c.l.b16 %v475
      %v561 = vunpack.c.h.b16 %v475
      %v562 = vunpack.c.l.b16 %v476
      %v563 = vunpack.c.l.b16 %v477
      %v564 = vunpack.c.h.b16 %v477
      %v565 = vunpack.c.l.b16 %v478
      %v566 = vunpack.c.l.b16 %v479
      %v567 = vunpack.c.h.b16 %v479
      %v568 = vunpack.c.l.b16 %v480
      %v569 = vunpack.c.l.b16 %v481
      %v570 = vunpack.c.h.b16 %v481
      %v571 = vunpack.c.l.b16 %v482
      %v572 = vunpack.c.l.b16 %v483
      %v573 = vunpack.c.h.b16 %v483
      %v574 = vunpack.c.l.b16 %v484
      %v575 = vunpack.c.l.b16 %v485
      %v576 = vunpack.c.h.b16 %v485
      %v577 = vunpack.c.l.b16 %v486
      %v578 = vunpack.c.l.b16 %v487
      %v579 = vunpack.c.h.b16 %v487
      %v580 = vunpack.c.l.b16 %v488
      %v581 = vunpack.c.l.b16 %v489
      %v582 = vunpack.c.h.b16 %v489
      %v583 = vunpack.c.l.b16 %v490
      %v584 = vunpack.c.l.b16 %v491
      %v585 = vunpack.c.h.b16 %v491
      %v586 = vunpack.c.l.b16 %v492
      %v587 = vunpack.c.l.b16 %v493
      %v588 = vunpack.c.h.b16 %v493
      %v589 = vunpack.c.l.b16 %v494
      %v590 = vunpack.c.l.b16 %v495
      %v591 = vunpack.c.h.b16 %v495
      %v592 = vunpack.c.l.b16 %v496
      %v593 = vunpack.c.l.b16 %v497
      %v594 = vunpack.c.h.b16 %v497
      %v595 = vunpack.c.l.b16 %v498
      %v596 = vpack.c.b16 %v551, %v548
      %v597 = vpack.c.b16 %v552, %v549
      %v598 = vpack.c.b16 %v553, %v550
      %v599 = vpack.c.b16 %v557, %v554
      %v600 = vpack.c.b16 %v558, %v555
      %v601 = vpack.c.b16 %v559, %v556
      %v602 = vpack.c.b16 %v563, %v560
      %v603 = vpack.c.b16 %v564, %v561
      %v604 = vpack.c.b16 %v565, %v562
      %v605 = vpack.c.b16 %v569, %v566
      %v606 = vpack.c.b16 %v570, %v567
      %v607 = vpack.c.b16 %v571, %v568
      %v608 = vpack.c.b16 %v575, %v572
      %v609 = vpack.c.b16 %v576, %v573
      %v610 = vpack.c.b16 %v577, %v574
      %v611 = vpack.c.b16 %v581, %v578
      %v612 = vpack.c.b16 %v582, %v579
      %v613 = vpack.c.b16 %v583, %v580
      %v614 = vpack.c.b16 %v587, %v584
      %v615 = vpack.c.b16 %v588, %v585
      %v616 = vpack.c.b16 %v589, %v586
      %v617 = vpack.c.b16 %v593, %v590
      %v618 = vpack.c.b16 %v594, %v591
      %v619 = vpack.c.b16 %v595, %v592
      %644 = vmatprep.subr.bf16.mxu0 %v618
      %645 = vmatpush1.bf16.msra.mxu0 %v617
      %646 = vmatprep.subr.bf16.mxu0 %v615
      %647 = vmatpush1.bf16.msra.mxu0 %v614
      %648 = vmatprep.subr.bf16.mxu0 %v612
      %649 = vmatpush1.bf16.msra.mxu0 %v611
      %650 = vmatprep.subr.bf16.mxu0 %v609
      %651 = vmatpush1.bf16.msra.mxu0 %v608
      %652 = vmatprep.subr.bf16.mxu0 %v606
      %653 = vmatpush1.bf16.msra.mxu0 %v605
      %654 = vmatprep.subr.bf16.mxu0 %v603
      %655 = vmatpush1.bf16.msra.mxu0 %v602
      %656 = vmatprep.subr.bf16.mxu0 %v600
      %657 = vmatpush1.bf16.msra.mxu0 %v599
      %658 = vmatprep.subr.bf16.mxu0 %v597
      %659 = vmatpush1.bf16.msra.mxu0 %v596
      %660 = vmatprep.subr.bf16.mxu0 0
      %661 = vmatpush2.bf16.msra.mxu0 0
      %662 = vmatprep.subr.bf16.mxu0 0
      %663 = vmatpush2.bf16.msra.mxu0 0
      %664 = vmatprep.subr.bf16.mxu0 0
      %665 = vmatpush2.bf16.msra.mxu0 0
      %666 = vmatprep.subr.bf16.mxu0 0
      %667 = vmatpush2.bf16.msra.mxu0 0
      %668 = vmatprep.subr.bf16.mxu0 0
      %669 = vmatpush2.bf16.msra.mxu0 0
      %670 = vmatprep.subr.bf16.mxu0 0
      %671 = vmatpush2.bf16.msra.mxu0 0
      %672 = vmatprep.subr.bf16.mxu0 0
      %673 = vmatpush2.bf16.msra.mxu0 0
      %674 = vmatprep.subr.bf16.mxu0 0
      %675 = vmatpush2.bf16.msra.mxu0 0
      %676 = vmatprep.mubr.bf16.mxu0 0
      %677 = vmatmul.mubr.bf16.gmra.mxu0 %v466
      %v678 = vpop.f32.mrf.mxu0
      %v679 = vadd.f32 %v504, %v678
      %v680 = vpop.f32.mrf.mxu0
      %v681 = vadd.f32 %v508, %v680
      %v682 = vpop.f32.mrf.mxu0
      %v683 = vpop.f32.mrf.mxu0
      %684 = vdwg.mxu0
      %685 = vmatprep.subr.bf16.mxu0 0
      %686 = vmatpush1.bf16.msra.mxu0 %v619
      %687 = vmatprep.subr.bf16.mxu0 0
      %688 = vmatpush1.bf16.msra.mxu0 %v616
      %689 = vmatprep.subr.bf16.mxu0 0
      %690 = vmatpush1.bf16.msra.mxu0 %v613
      %691 = vmatprep.subr.bf16.mxu0 0
      %692 = vmatpush1.bf16.msra.mxu0 %v610
      %693 = vmatprep.subr.bf16.mxu0 0
      %694 = vmatpush1.bf16.msra.mxu0 %v607
      %695 = vmatprep.subr.bf16.mxu0 0
      %696 = vmatpush1.bf16.msra.mxu0 %v604
      %697 = vmatprep.subr.bf16.mxu0 0
      %698 = vmatpush1.bf16.msra.mxu0 %v601
      %699 = vmatprep.subr.bf16.mxu0 0
      %700 = vmatpush1.bf16.msra.mxu0 %v598
      %701 = vmatprep.subr.bf16.mxu0 0
      %702 = vmatpush2.bf16.msra.mxu0 0
      %703 = vmatprep.subr.bf16.mxu0 0
      %704 = vmatpush2.bf16.msra.mxu0 0
      %705 = vmatprep.subr.bf16.mxu0 0
      %706 = vmatpush2.bf16.msra.mxu0 0
      %707 = vmatprep.subr.bf16.mxu0 0
      %708 = vmatpush2.bf16.msra.mxu0 0
      %709 = vmatprep.subr.bf16.mxu0 0
      %710 = vmatpush2.bf16.msra.mxu0 0
      %711 = vmatprep.subr.bf16.mxu0 0
      %712 = vmatpush2.bf16.msra.mxu0 0
      %713 = vmatprep.subr.bf16.mxu0 0
      %714 = vmatpush2.bf16.msra.mxu0 0
      %715 = vmatprep.subr.bf16.mxu0 0
      %716 = vmatpush2.bf16.msra.mxu0 0
      %717 = vmatprep.mubr.bf16.mxu0 0
      %718 = vmatmul.mubr.bf16.gmra.mxu0 %v466
      %v719 = vpop.f32.mrf.mxu0
      %v720 = vadd.f32 %v512, %v719
      %v721 = vpop.f32.mrf.mxu0
      %v722 = vpop.f32.mrf.mxu0
      %v723 = vpop.f32.mrf.mxu0
      %724 = vdwg.mxu0
      %726 = vrot.lane.b32.xlu0 %v679, 96
      %v727 = vpop.permute.xlu0 %726
      %729 = vrot.lane.b32.xlu0 %v679, 64
      %v730 = vpop.permute.xlu0 %729
      %732 = vrot.lane.b32.xlu0 %v679, 32
      %v733 = vpop.permute.xlu0 %732
      %v735 = vpack.c.bf16 %v679, %v679
      %v736 = vpack.c.bf16 %v727, %v727
      %v737 = vpack.c.bf16 %v730, %v730
      %v738 = vpack.c.bf16 %v733, %v733
      %740 = vrot.lane.b32.xlu0 %v681, 96
      %v741 = vpop.permute.xlu0 %740
      %743 = vrot.lane.b32.xlu0 %v681, 64
      %v744 = vpop.permute.xlu0 %743
      %746 = vrot.lane.b32.xlu0 %v681, 32
      %v747 = vpop.permute.xlu0 %746
      %v749 = vpack.c.bf16 %v681, %v681
      %v750 = vpack.c.bf16 %v741, %v741
      %v751 = vpack.c.bf16 %v744, %v744
      %v752 = vpack.c.bf16 %v747, %v747
      %754 = vrot.lane.b32.xlu0 %v720, 96
      %v755 = vpop.permute.xlu0 %754
      %757 = vrot.lane.b32.xlu0 %v720, 64
      %v758 = vpop.permute.xlu0 %757
      %760 = vrot.lane.b32.xlu0 %v720, 32
      %v761 = vpop.permute.xlu0 %760
      %v763 = vpack.c.bf16 %v720, %v720
      %v764 = vpack.c.bf16 %v755, %v755
      %v765 = vpack.c.bf16 %v758, %v758
      %v766 = vpack.c.bf16 %v761, %v761
      %vm767 = vcmask 261120
      %v769 = vsel %vm767, %v735, 0
      %v772 = vsel %vm767, %v749, 0
      %774 = vmatprep.subr.bf16.mxu0 0
      %775 = vmatpush1.bf16.xpose.msra.mxu0 0
      %776 = vmatprep.subr.bf16.mxu0 0
      %777 = vmatpush1.bf16.xpose.msra.mxu0 0
      %778 = vmatprep.subr.bf16.mxu0 0
      %779 = vmatpush1.bf16.xpose.msra.mxu0 0
      %780 = vmatprep.subr.bf16.mxu0 0
      %781 = vmatpush1.bf16.xpose.msra.mxu0 0
      %782 = vmatprep.subr.bf16.mxu0 0
      %783 = vmatpush1.bf16.xpose.msra.mxu0 0
      %784 = vmatprep.subr.bf16.mxu0 0
      %785 = vmatpush1.bf16.xpose.msra.mxu0 0
      %786 = vmatprep.subr.bf16.mxu0 0
      %787 = vmatpush1.bf16.xpose.msra.mxu0 0
      %788 = vmatprep.subr.bf16.mxu0 0
      %789 = vmatpush1.bf16.xpose.msra.mxu0 %v772
      %790 = vmatprep.subr.bf16.mxu0 0
      %791 = vmatpush2.bf16.xpose.msra.mxu0 0
      %792 = vmatprep.subr.bf16.mxu0 0
      %793 = vmatpush2.bf16.xpose.msra.mxu0 0
      %794 = vmatprep.subr.bf16.mxu0 0
      %795 = vmatpush2.bf16.xpose.msra.mxu0 0
      %796 = vmatprep.subr.bf16.mxu0 0
      %797 = vmatpush2.bf16.xpose.msra.mxu0 0
      %798 = vmatprep.subr.bf16.mxu0 0
      %799 = vmatpush2.bf16.xpose.msra.mxu0 0
      %800 = vmatprep.subr.bf16.mxu0 0
      %801 = vmatpush2.bf16.xpose.msra.mxu0 0
      %802 = vmatprep.subr.bf16.mxu0 0
      %803 = vmatpush2.bf16.xpose.msra.mxu0 0
      %804 = vmatprep.subr.bf16.mxu0 0
      %805 = vmatpush2.bf16.xpose.msra.mxu0 0
      %806 = vmatprep.mubr.bf16.mxu0 0
      %807 = vmatmul.mubr.bf16.gmra.mxu0 %v769
      %v808 = vpop.f32.mrf.mxu0
      %v809 = vadd.f32 0.0, %v808
      %v810 = vpop.f32.mrf.mxu0
      %v811 = vpop.f32.mrf.mxu0
      %v812 = vpop.f32.mrf.mxu0
      %813 = vdwg.mxu0
      %v815 = vsel %vm767, %v736, 0
      %v818 = vsel %vm767, %v750, 0
      %820 = vmatprep.subr.bf16.mxu0 0
      %821 = vmatpush1.bf16.xpose.msra.mxu0 0
      %822 = vmatprep.subr.bf16.mxu0 0
      %823 = vmatpush1.bf16.xpose.msra.mxu0 0
      %824 = vmatprep.subr.bf16.mxu0 0
      %825 = vmatpush1.bf16.xpose.msra.mxu0 0
      %826 = vmatprep.subr.bf16.mxu0 0
      %827 = vmatpush1.bf16.xpose.msra.mxu0 0
      %828 = vmatprep.subr.bf16.mxu0 0
      %829 = vmatpush1.bf16.xpose.msra.mxu0 0
      %830 = vmatprep.subr.bf16.mxu0 0
      %831 = vmatpush1.bf16.xpose.msra.mxu0 0
      %832 = vmatprep.subr.bf16.mxu0 0
      %833 = vmatpush1.bf16.xpose.msra.mxu0 0
      %834 = vmatprep.subr.bf16.mxu0 0
      %835 = vmatpush1.bf16.xpose.msra.mxu0 %v818
      %836 = vmatprep.subr.bf16.mxu0 0
      %837 = vmatpush2.bf16.xpose.msra.mxu0 0
      %838 = vmatprep.subr.bf16.mxu0 0
      %839 = vmatpush2.bf16.xpose.msra.mxu0 0
      %840 = vmatprep.subr.bf16.mxu0 0
      %841 = vmatpush2.bf16.xpose.msra.mxu0 0
      %842 = vmatprep.subr.bf16.mxu0 0
      %843 = vmatpush2.bf16.xpose.msra.mxu0 0
      %844 = vmatprep.subr.bf16.mxu0 0
      %845 = vmatpush2.bf16.xpose.msra.mxu0 0
      %846 = vmatprep.subr.bf16.mxu0 0
      %847 = vmatpush2.bf16.xpose.msra.mxu0 0
      %848 = vmatprep.subr.bf16.mxu0 0
      %849 = vmatpush2.bf16.xpose.msra.mxu0 0
      %850 = vmatprep.subr.bf16.mxu0 0
      %851 = vmatpush2.bf16.xpose.msra.mxu0 0
      %852 = vmatprep.mubr.bf16.mxu0 0
      %853 = vmatmul.mubr.bf16.gmra.mxu0 %v815
      %v854 = vpop.f32.mrf.mxu0
      %v855 = vadd.f32 0.0, %v854
      %v856 = vpop.f32.mrf.mxu0
      %v857 = vpop.f32.mrf.mxu0
      %v858 = vpop.f32.mrf.mxu0
      %859 = vdwg.mxu0
      %v861 = vsel %vm767, %v737, 0
      %v864 = vsel %vm767, %v751, 0
      %866 = vmatprep.subr.bf16.mxu0 0
      %867 = vmatpush1.bf16.xpose.msra.mxu0 0
      %868 = vmatprep.subr.bf16.mxu0 0
      %869 = vmatpush1.bf16.xpose.msra.mxu0 0
      %870 = vmatprep.subr.bf16.mxu0 0
      %871 = vmatpush1.bf16.xpose.msra.mxu0 0
      %872 = vmatprep.subr.bf16.mxu0 0
      %873 = vmatpush1.bf16.xpose.msra.mxu0 0
      %874 = vmatprep.subr.bf16.mxu0 0
      %875 = vmatpush1.bf16.xpose.msra.mxu0 0
      %876 = vmatprep.subr.bf16.mxu0 0
      %877 = vmatpush1.bf16.xpose.msra.mxu0 0
      %878 = vmatprep.subr.bf16.mxu0 0
      %879 = vmatpush1.bf16.xpose.msra.mxu0 0
      %880 = vmatprep.subr.bf16.mxu0 0
      %881 = vmatpush1.bf16.xpose.msra.mxu0 %v864
      %882 = vmatprep.subr.bf16.mxu0 0
      %883 = vmatpush2.bf16.xpose.msra.mxu0 0
      %884 = vmatprep.subr.bf16.mxu0 0
      %885 = vmatpush2.bf16.xpose.msra.mxu0 0
      %886 = vmatprep.subr.bf16.mxu0 0
      %887 = vmatpush2.bf16.xpose.msra.mxu0 0
      %888 = vmatprep.subr.bf16.mxu0 0
      %889 = vmatpush2.bf16.xpose.msra.mxu0 0
      %890 = vmatprep.subr.bf16.mxu0 0
      %891 = vmatpush2.bf16.xpose.msra.mxu0 0
      %892 = vmatprep.subr.bf16.mxu0 0
      %893 = vmatpush2.bf16.xpose.msra.mxu0 0
      %894 = vmatprep.subr.bf16.mxu0 0
      %895 = vmatpush2.bf16.xpose.msra.mxu0 0
      %896 = vmatprep.subr.bf16.mxu0 0
      %897 = vmatpush2.bf16.xpose.msra.mxu0 0
      %898 = vmatprep.mubr.bf16.mxu0 0
      %899 = vmatmul.mubr.bf16.gmra.mxu0 %v861
      %v900 = vpop.f32.mrf.mxu0
      %v901 = vadd.f32 0.0, %v900
      %v902 = vpop.f32.mrf.mxu0
      %v903 = vpop.f32.mrf.mxu0
      %v904 = vpop.f32.mrf.mxu0
      %905 = vdwg.mxu0
      %v907 = vsel %vm767, %v738, 0
      %v910 = vsel %vm767, %v752, 0
      %912 = vmatprep.subr.bf16.mxu0 0
      %913 = vmatpush1.bf16.xpose.msra.mxu0 0
      %914 = vmatprep.subr.bf16.mxu0 0
      %915 = vmatpush1.bf16.xpose.msra.mxu0 0
      %916 = vmatprep.subr.bf16.mxu0 0
      %917 = vmatpush1.bf16.xpose.msra.mxu0 0
      %918 = vmatprep.subr.bf16.mxu0 0
      %919 = vmatpush1.bf16.xpose.msra.mxu0 0
      %920 = vmatprep.subr.bf16.mxu0 0
      %921 = vmatpush1.bf16.xpose.msra.mxu0 0
      %922 = vmatprep.subr.bf16.mxu0 0
      %923 = vmatpush1.bf16.xpose.msra.mxu0 0
      %924 = vmatprep.subr.bf16.mxu0 0
      %925 = vmatpush1.bf16.xpose.msra.mxu0 0
      %926 = vmatprep.subr.bf16.mxu0 0
      %927 = vmatpush1.bf16.xpose.msra.mxu0 %v910
      %928 = vmatprep.subr.bf16.mxu0 0
      %929 = vmatpush2.bf16.xpose.msra.mxu0 0
      %930 = vmatprep.subr.bf16.mxu0 0
      %931 = vmatpush2.bf16.xpose.msra.mxu0 0
      %932 = vmatprep.subr.bf16.mxu0 0
      %933 = vmatpush2.bf16.xpose.msra.mxu0 0
      %934 = vmatprep.subr.bf16.mxu0 0
      %935 = vmatpush2.bf16.xpose.msra.mxu0 0
      %936 = vmatprep.subr.bf16.mxu0 0
      %937 = vmatpush2.bf16.xpose.msra.mxu0 0
      %938 = vmatprep.subr.bf16.mxu0 0
      %939 = vmatpush2.bf16.xpose.msra.mxu0 0
      %940 = vmatprep.subr.bf16.mxu0 0
      %941 = vmatpush2.bf16.xpose.msra.mxu0 0
      %942 = vmatprep.subr.bf16.mxu0 0
      %943 = vmatpush2.bf16.xpose.msra.mxu0 0
      %944 = vmatprep.mubr.bf16.mxu0 0
      %945 = vmatmul.mubr.bf16.gmra.mxu0 %v907
      %v946 = vpop.f32.mrf.mxu0
      %v947 = vadd.f32 0.0, %v946
      %v948 = vpop.f32.mrf.mxu0
      %v949 = vpop.f32.mrf.mxu0
      %v950 = vpop.f32.mrf.mxu0
      %951 = vdwg.mxu0
      %v952 = vmul.f32 %v809, 0.17677669
      %v953 = vmul.f32 %v855, 0.17677669
      %v954 = vmul.f32 %v901, 0.17677669
      %v955 = vmul.f32 %v947, 0.17677669
      %vm956 = vcmask 64512
      %v957 = vsel %vm956, %v952, -inf
      %958 = vmax.xlane.f32.xlu0 %v957
      %v959 = vpop.xlane.xlu0 %958
      %v960 = vsel %vm956, %v953, -inf
      %961 = vmax.xlane.f32.xlu0 %v960
      %v962 = vpop.xlane.xlu0 %961
      %v963 = vsel %vm956, %v954, -inf
      %964 = vmax.xlane.f32.xlu0 %v963
      %v965 = vpop.xlane.xlu0 %964
      %v966 = vsel %vm956, %v955, -inf
      %967 = vmax.xlane.f32.xlu0 %v966
      %v968 = vpop.xlane.xlu0 %967
      %v969 = vsub.f32 %v952, %v959
      %v970 = vsub.f32 %v953, %v962
      %v971 = vsub.f32 %v954, %v965
      %v972 = vsub.f32 %v955, %v968
      %v973 = vmul.f32 %v969, 1.442695
      %v974 = vpow.pop %v973
      %v975 = vmul.f32 %v970, 1.442695
      %v976 = vpow.pop %v975
      %v977 = vmul.f32 %v971, 1.442695
      %v978 = vpow.pop %v977
      %v979 = vmul.f32 %v972, 1.442695
      %v980 = vpow.pop %v979
      %v981 = vsel %vm956, %v974, 0.0
      %982 = vadd.xlane.f32.xlu0 %v981
      %v983 = vpop.xlane.xlu0 %982
      %v984 = vsel %vm956, %v976, 0.0
      %985 = vadd.xlane.f32.xlu0 %v984
      %v986 = vpop.xlane.xlu0 %985
      %v987 = vsel %vm956, %v978, 0.0
      %988 = vadd.xlane.f32.xlu0 %v987
      %v989 = vpop.xlane.xlu0 %988
      %v990 = vsel %vm956, %v980, 0.0
      %991 = vadd.xlane.f32.xlu0 %v990
      %v992 = vpop.xlane.xlu0 %991
      %v993 = vrcp.pop %v983
      %v994 = vrcp.pop %v986
      %v995 = vrcp.pop %v989
      %v996 = vrcp.pop %v992
      %v997 = vmul.f32 %v974, %v993
      %v998 = vmul.f32 %v976, %v994
      %v999 = vmul.f32 %v978, %v995
      %v1000 = vmul.f32 %v980, %v996
      %v1001 = vpack.c.bf16 %v997, %v997
      %v1002 = vpack.c.bf16 %v998, %v998
      %v1003 = vpack.c.bf16 %v999, %v999
      %v1004 = vpack.c.bf16 %v1000, %v1000
      %v1006 = vsel %vm956, %v1001, 0
      %vm1008 = vcmask 1043456
      %v1010 = vsel %vm1008, %v763, 0
      %1012 = vmatprep.subr.bf16.mxu0 0
      %1013 = vmatpush1.bf16.msra.mxu0 0
      %1014 = vmatprep.subr.bf16.mxu0 0
      %1015 = vmatpush1.bf16.msra.mxu0 0
      %1016 = vmatprep.subr.bf16.mxu0 0
      %1017 = vmatpush1.bf16.msra.mxu0 0
      %1018 = vmatprep.subr.bf16.mxu0 0
      %1019 = vmatpush1.bf16.msra.mxu0 0
      %1020 = vmatprep.subr.bf16.mxu0 0
      %1021 = vmatpush1.bf16.msra.mxu0 0
      %1022 = vmatprep.subr.bf16.mxu0 0
      %1023 = vmatpush1.bf16.msra.mxu0 0
      %1024 = vmatprep.subr.bf16.mxu0 0
      %1025 = vmatpush1.bf16.msra.mxu0 0
      %1026 = vmatprep.subr.bf16.mxu0 0
      %1027 = vmatpush1.bf16.msra.mxu0 %v1010
      %1028 = vmatprep.subr.bf16.mxu0 0
      %1029 = vmatpush2.bf16.msra.mxu0 0
      %1030 = vmatprep.subr.bf16.mxu0 0
      %1031 = vmatpush2.bf16.msra.mxu0 0
      %1032 = vmatprep.subr.bf16.mxu0 0
      %1033 = vmatpush2.bf16.msra.mxu0 0
      %1034 = vmatprep.subr.bf16.mxu0 0
      %1035 = vmatpush2.bf16.msra.mxu0 0
      %1036 = vmatprep.subr.bf16.mxu0 0
      %1037 = vmatpush2.bf16.msra.mxu0 0
      %1038 = vmatprep.subr.bf16.mxu0 0
      %1039 = vmatpush2.bf16.msra.mxu0 0
      %1040 = vmatprep.subr.bf16.mxu0 0
      %1041 = vmatpush2.bf16.msra.mxu0 0
      %1042 = vmatprep.subr.bf16.mxu0 0
      %1043 = vmatpush2.bf16.msra.mxu0 0
      %1044 = vmatprep.mubr.bf16.mxu0 0
      %1045 = vmatmul.mubr.bf16.gmra.mxu0 %v1006
      %v1046 = vpop.f32.mrf.mxu0
      %v1047 = vadd.f32 0.0, %v1046
      %v1048 = vpop.f32.mrf.mxu0
      %v1049 = vpop.f32.mrf.mxu0
      %v1050 = vpop.f32.mrf.mxu0
      %1051 = vdwg.mxu0
      %v1053 = vsel %vm956, %v1002, 0
      %v1056 = vsel %vm1008, %v764, 0
      %1058 = vmatprep.subr.bf16.mxu0 0
      %1059 = vmatpush1.bf16.msra.mxu0 0
      %1060 = vmatprep.subr.bf16.mxu0 0
      %1061 = vmatpush1.bf16.msra.mxu0 0
      %1062 = vmatprep.subr.bf16.mxu0 0
      %1063 = vmatpush1.bf16.msra.mxu0 0
      %1064 = vmatprep.subr.bf16.mxu0 0
      %1065 = vmatpush1.bf16.msra.mxu0 0
      %1066 = vmatprep.subr.bf16.mxu0 0
      %1067 = vmatpush1.bf16.msra.mxu0 0
      %1068 = vmatprep.subr.bf16.mxu0 0
      %1069 = vmatpush1.bf16.msra.mxu0 0
      %1070 = vmatprep.subr.bf16.mxu0 0
      %1071 = vmatpush1.bf16.msra.mxu0 0
      %1072 = vmatprep.subr.bf16.mxu0 0
      %1073 = vmatpush1.bf16.msra.mxu0 %v1056
      %1074 = vmatprep.subr.bf16.mxu0 0
      %1075 = vmatpush2.bf16.msra.mxu0 0
      %1076 = vmatprep.subr.bf16.mxu0 0
      %1077 = vmatpush2.bf16.msra.mxu0 0
      %1078 = vmatprep.subr.bf16.mxu0 0
      %1079 = vmatpush2.bf16.msra.mxu0 0
      %1080 = vmatprep.subr.bf16.mxu0 0
      %1081 = vmatpush2.bf16.msra.mxu0 0
      %1082 = vmatprep.subr.bf16.mxu0 0
      %1083 = vmatpush2.bf16.msra.mxu0 0
      %1084 = vmatprep.subr.bf16.mxu0 0
      %1085 = vmatpush2.bf16.msra.mxu0 0
      %1086 = vmatprep.subr.bf16.mxu0 0
      %1087 = vmatpush2.bf16.msra.mxu0 0
      %1088 = vmatprep.subr.bf16.mxu0 0
      %1089 = vmatpush2.bf16.msra.mxu0 0
      %1090 = vmatprep.mubr.bf16.mxu0 0
      %1091 = vmatmul.mubr.bf16.gmra.mxu0 %v1053
      %v1092 = vpop.f32.mrf.mxu0
      %v1093 = vadd.f32 0.0, %v1092
      %v1094 = vpop.f32.mrf.mxu0
      %v1095 = vpop.f32.mrf.mxu0
      %v1096 = vpop.f32.mrf.mxu0
      %1097 = vdwg.mxu0
      %v1099 = vsel %vm956, %v1003, 0
      %v1102 = vsel %vm1008, %v765, 0
      %1104 = vmatprep.subr.bf16.mxu0 0
      %1105 = vmatpush1.bf16.msra.mxu0 0
      %1106 = vmatprep.subr.bf16.mxu0 0
      %1107 = vmatpush1.bf16.msra.mxu0 0
      %1108 = vmatprep.subr.bf16.mxu0 0
      %1109 = vmatpush1.bf16.msra.mxu0 0
      %1110 = vmatprep.subr.bf16.mxu0 0
      %1111 = vmatpush1.bf16.msra.mxu0 0
      %1112 = vmatprep.subr.bf16.mxu0 0
      %1113 = vmatpush1.bf16.msra.mxu0 0
      %1114 = vmatprep.subr.bf16.mxu0 0
      %1115 = vmatpush1.bf16.msra.mxu0 0
      %1116 = vmatprep.subr.bf16.mxu0 0
      %1117 = vmatpush1.bf16.msra.mxu0 0
      %1118 = vmatprep.subr.bf16.mxu0 0
      %1119 = vmatpush1.bf16.msra.mxu0 %v1102
      %1120 = vmatprep.subr.bf16.mxu0 0
      %1121 = vmatpush2.bf16.msra.mxu0 0
      %1122 = vmatprep.subr.bf16.mxu0 0
      %1123 = vmatpush2.bf16.msra.mxu0 0
      %1124 = vmatprep.subr.bf16.mxu0 0
      %1125 = vmatpush2.bf16.msra.mxu0 0
      %1126 = vmatprep.subr.bf16.mxu0 0
      %1127 = vmatpush2.bf16.msra.mxu0 0
      %1128 = vmatprep.subr.bf16.mxu0 0
      %1129 = vmatpush2.bf16.msra.mxu0 0
      %1130 = vmatprep.subr.bf16.mxu0 0
      %1131 = vmatpush2.bf16.msra.mxu0 0
      %1132 = vmatprep.subr.bf16.mxu0 0
      %1133 = vmatpush2.bf16.msra.mxu0 0
      %1134 = vmatprep.subr.bf16.mxu0 0
      %1135 = vmatpush2.bf16.msra.mxu0 0
      %1136 = vmatprep.mubr.bf16.mxu0 0
      %1137 = vmatmul.mubr.bf16.gmra.mxu0 %v1099
      %v1138 = vpop.f32.mrf.mxu0
      %v1139 = vadd.f32 0.0, %v1138
      %v1140 = vpop.f32.mrf.mxu0
      %v1141 = vpop.f32.mrf.mxu0
      %v1142 = vpop.f32.mrf.mxu0
      %1143 = vdwg.mxu0
      %v1145 = vsel %vm956, %v1004, 0
      %v1148 = vsel %vm1008, %v766, 0
      %1150 = vmatprep.subr.bf16.mxu0 0
      %1151 = vmatpush1.bf16.msra.mxu0 0
      %1152 = vmatprep.subr.bf16.mxu0 0
      %1153 = vmatpush1.bf16.msra.mxu0 0
      %1154 = vmatprep.subr.bf16.mxu0 0
      %1155 = vmatpush1.bf16.msra.mxu0 0
      %1156 = vmatprep.subr.bf16.mxu0 0
      %1157 = vmatpush1.bf16.msra.mxu0 0
      %1158 = vmatprep.subr.bf16.mxu0 0
      %1159 = vmatpush1.bf16.msra.mxu0 0
      %1160 = vmatprep.subr.bf16.mxu0 0
      %1161 = vmatpush1.bf16.msra.mxu0 0
      %1162 = vmatprep.subr.bf16.mxu0 0
      %1163 = vmatpush1.bf16.msra.mxu0 0
      %1164 = vmatprep.subr.bf16.mxu0 0
      %1165 = vmatpush1.bf16.msra.mxu0 %v1148
      %1166 = vmatprep.subr.bf16.mxu0 0
      %1167 = vmatpush2.bf16.msra.mxu0 0
      %1168 = vmatprep.subr.bf16.mxu0 0
      %1169 = vmatpush2.bf16.msra.mxu0 0
      %1170 = vmatprep.subr.bf16.mxu0 0
      %1171 = vmatpush2.bf16.msra.mxu0 0
      %1172 = vmatprep.subr.bf16.mxu0 0
      %1173 = vmatpush2.bf16.msra.mxu0 0
      %1174 = vmatprep.subr.bf16.mxu0 0
      %1175 = vmatpush2.bf16.msra.mxu0 0
      %1176 = vmatprep.subr.bf16.mxu0 0
      %1177 = vmatpush2.bf16.msra.mxu0 0
      %1178 = vmatprep.subr.bf16.mxu0 0
      %1179 = vmatpush2.bf16.msra.mxu0 0
      %1180 = vmatprep.subr.bf16.mxu0 0
      %1181 = vmatpush2.bf16.msra.mxu0 0
      %1182 = vmatprep.mubr.bf16.mxu0 0
      %1183 = vmatmul.mubr.bf16.gmra.mxu0 %v1145
      %v1184 = vpop.f32.mrf.mxu0
      %v1185 = vadd.f32 0.0, %v1184
      %v1186 = vpop.f32.mrf.mxu0
      %v1187 = vpop.f32.mrf.mxu0
      %v1188 = vpop.f32.mrf.mxu0
      %1189 = vdwg.mxu0
      %v1190 = vpack.c.bf16 %v1047, %v1047
      %v1191 = vld [vmem:[%s5] sm:$0xf]
      %v1192 = vld [vmem:[%s5 + $0x4] sm:$0xf]
      %v1193 = vld [vmem:[%s5 + $0x8] sm:$0xf]
      %v1194 = vld [vmem:[%s5 + $0xc] sm:$0xf]
      %v1195 = vpack.c.bf16 %v1093, %v1093
      %v1196 = vld [vmem:[%s5 + $0x10] sm:$0xf]
      %v1197 = vld [vmem:[%s5 + $0x14] sm:$0xf]
      %v1198 = vld [vmem:[%s5 + $0x18] sm:$0xf]
      %v1199 = vld [vmem:[%s5 + $0x1c] sm:$0xf]
      %v1204 = vunpack.c.l.b16 %v1196
      %v1205 = vunpack.c.l.b16 %v1197
      %v1206 = vunpack.c.l.b16 %v1198
      %v1207 = vunpack.c.l.b16 %v1199
      %v1208 = vpack.c.b16 %v1205, %v1204
      %v1209 = vpack.c.b16 %v1207, %v1206
      %v1213 = vsel %vm767, %v1195, 0
      %1215 = vmatprep.subr.bf16.mxu0 0
      %1216 = vmatpush1.bf16.msra.mxu0 0
      %1217 = vmatprep.subr.bf16.mxu0 0
      %1218 = vmatpush1.bf16.msra.mxu0 0
      %1219 = vmatprep.subr.bf16.mxu0 0
      %1220 = vmatpush1.bf16.msra.mxu0 0
      %1221 = vmatprep.subr.bf16.mxu0 0
      %1222 = vmatpush1.bf16.msra.mxu0 0
      %1223 = vmatprep.subr.bf16.mxu0 0
      %1224 = vmatpush1.bf16.msra.mxu0 0
      %1225 = vmatprep.subr.bf16.mxu0 0
      %1226 = vmatpush1.bf16.msra.mxu0 0
      %1227 = vmatprep.subr.bf16.mxu0 0
      %1228 = vmatpush1.bf16.msra.mxu0 %v1209
      %1229 = vmatprep.subr.bf16.mxu0 0
      %1230 = vmatpush1.bf16.msra.mxu0 %v1208
      %1231 = vmatprep.subr.bf16.mxu0 0
      %1232 = vmatpush2.bf16.msra.mxu0 0
      %1233 = vmatprep.subr.bf16.mxu0 0
      %1234 = vmatpush2.bf16.msra.mxu0 0
      %1235 = vmatprep.subr.bf16.mxu0 0
      %1236 = vmatpush2.bf16.msra.mxu0 0
      %1237 = vmatprep.subr.bf16.mxu0 0
      %1238 = vmatpush2.bf16.msra.mxu0 0
      %1239 = vmatprep.subr.bf16.mxu0 0
      %1240 = vmatpush2.bf16.msra.mxu0 0
      %1241 = vmatprep.subr.bf16.mxu0 0
      %1242 = vmatpush2.bf16.msra.mxu0 0
      %1243 = vmatprep.subr.bf16.mxu0 0
      %1244 = vmatpush2.bf16.msra.mxu0 0
      %1245 = vmatprep.subr.bf16.mxu0 0
      %1246 = vmatpush2.bf16.msra.mxu0 0
      %1247 = vmatprep.mubr.bf16.mxu0 0
      %1248 = vmatmul.mubr.bf16.gmra.mxu0 %v1213
      %v1249 = vpop.f32.mrf.mxu0
      %v1250 = vadd.f32 0.0, %v1249
      %v1251 = vpop.f32.mrf.mxu0
      %v1252 = vpop.f32.mrf.mxu0
      %v1253 = vpop.f32.mrf.mxu0
      %1254 = vdwg.mxu0
      %v1259 = vunpack.c.l.b16 %v1191
      %v1260 = vunpack.c.l.b16 %v1192
      %v1261 = vunpack.c.l.b16 %v1193
      %v1262 = vunpack.c.l.b16 %v1194
      %v1263 = vpack.c.b16 %v1260, %v1259
      %v1264 = vpack.c.b16 %v1262, %v1261
      %v1268 = vsel %vm767, %v1190, 0
      %1270 = vmatprep.subr.bf16.mxu0 0
      %1271 = vmatpush1.bf16.msra.mxu0 0
      %1272 = vmatprep.subr.bf16.mxu0 0
      %1273 = vmatpush1.bf16.msra.mxu0 0
      %1274 = vmatprep.subr.bf16.mxu0 0
      %1275 = vmatpush1.bf16.msra.mxu0 0
      %1276 = vmatprep.subr.bf16.mxu0 0
      %1277 = vmatpush1.bf16.msra.mxu0 0
      %1278 = vmatprep.subr.bf16.mxu0 0
      %1279 = vmatpush1.bf16.msra.mxu0 0
      %1280 = vmatprep.subr.bf16.mxu0 0
      %1281 = vmatpush1.bf16.msra.mxu0 0
      %1282 = vmatprep.subr.bf16.mxu0 0
      %1283 = vmatpush1.bf16.msra.mxu0 %v1264
      %1284 = vmatprep.subr.bf16.mxu0 0
      %1285 = vmatpush1.bf16.msra.mxu0 %v1263
      %1286 = vmatprep.subr.bf16.mxu0 0
      %1287 = vmatpush2.bf16.msra.mxu0 0
      %1288 = vmatprep.subr.bf16.mxu0 0
      %1289 = vmatpush2.bf16.msra.mxu0 0
      %1290 = vmatprep.subr.bf16.mxu0 0
      %1291 = vmatpush2.bf16.msra.mxu0 0
      %1292 = vmatprep.subr.bf16.mxu0 0
      %1293 = vmatpush2.bf16.msra.mxu0 0
      %1294 = vmatprep.subr.bf16.mxu0 0
      %1295 = vmatpush2.bf16.msra.mxu0 0
      %1296 = vmatprep.subr.bf16.mxu0 0
      %1297 = vmatpush2.bf16.msra.mxu0 0
      %1298 = vmatprep.subr.bf16.mxu0 0
      %1299 = vmatpush2.bf16.msra.mxu0 0
      %1300 = vmatprep.subr.bf16.mxu0 0
      %1301 = vmatpush2.bf16.msra.mxu0 0
      %1302 = vmatprep.mubr.bf16.mxu0 0
      %1303 = vmatmul.mubr.bf16.gmra.mxu0 %v1268
      %v1304 = vpop.f32.mrf.mxu0
      %v1305 = vadd.f32 %v1250, %v1304
      %v1306 = vpop.f32.mrf.mxu0
      %v1307 = vpop.f32.mrf.mxu0
      %v1308 = vpop.f32.mrf.mxu0
      %1309 = vdwg.mxu0
      %v1310 = vpack.c.bf16 %v1139, %v1139
      %v1311 = vld [vmem:[%s5 + $0x20] sm:$0xf]
      %v1312 = vld [vmem:[%s5 + $0x24] sm:$0xf]
      %v1313 = vld [vmem:[%s5 + $0x28] sm:$0xf]
      %v1314 = vld [vmem:[%s5 + $0x2c] sm:$0xf]
      %v1319 = vunpack.c.l.b16 %v1311
      %v1320 = vunpack.c.l.b16 %v1312
      %v1321 = vunpack.c.l.b16 %v1313
      %v1322 = vunpack.c.l.b16 %v1314
      %v1323 = vpack.c.b16 %v1320, %v1319
      %v1324 = vpack.c.b16 %v1322, %v1321
      %v1328 = vsel %vm767, %v1310, 0
      %1330 = vmatprep.subr.bf16.mxu0 0
      %1331 = vmatpush1.bf16.msra.mxu0 0
      %1332 = vmatprep.subr.bf16.mxu0 0
      %1333 = vmatpush1.bf16.msra.mxu0 0
      %1334 = vmatprep.subr.bf16.mxu0 0
      %1335 = vmatpush1.bf16.msra.mxu0 0
      %1336 = vmatprep.subr.bf16.mxu0 0
      %1337 = vmatpush1.bf16.msra.mxu0 0
      %1338 = vmatprep.subr.bf16.mxu0 0
      %1339 = vmatpush1.bf16.msra.mxu0 0
      %1340 = vmatprep.subr.bf16.mxu0 0
      %1341 = vmatpush1.bf16.msra.mxu0 0
      %1342 = vmatprep.subr.bf16.mxu0 0
      %1343 = vmatpush1.bf16.msra.mxu0 %v1324
      %1344 = vmatprep.subr.bf16.mxu0 0
      %1345 = vmatpush1.bf16.msra.mxu0 %v1323
      %1346 = vmatprep.subr.bf16.mxu0 0
      %1347 = vmatpush2.bf16.msra.mxu0 0
      %1348 = vmatprep.subr.bf16.mxu0 0
      %1349 = vmatpush2.bf16.msra.mxu0 0
      %1350 = vmatprep.subr.bf16.mxu0 0
      %1351 = vmatpush2.bf16.msra.mxu0 0
      %1352 = vmatprep.subr.bf16.mxu0 0
      %1353 = vmatpush2.bf16.msra.mxu0 0
      %1354 = vmatprep.subr.bf16.mxu0 0
      %1355 = vmatpush2.bf16.msra.mxu0 0
      %1356 = vmatprep.subr.bf16.mxu0 0
      %1357 = vmatpush2.bf16.msra.mxu0 0
      %1358 = vmatprep.subr.bf16.mxu0 0
      %1359 = vmatpush2.bf16.msra.mxu0 0
      %1360 = vmatprep.subr.bf16.mxu0 0
      %1361 = vmatpush2.bf16.msra.mxu0 0
      %1362 = vmatprep.mubr.bf16.mxu0 0
      %1363 = vmatmul.mubr.bf16.gmra.mxu0 %v1328
      %v1364 = vpop.f32.mrf.mxu0
      %v1365 = vadd.f32 0.0, %v1364
      %v1366 = vpop.f32.mrf.mxu0
      %v1367 = vpop.f32.mrf.mxu0
      %v1368 = vpop.f32.mrf.mxu0
      %1369 = vdwg.mxu0
      %v1370 = vadd.f32 %v1305, %v1365
      %v1371 = vpack.c.bf16 %v1185, %v1185
      %v1372 = vld [vmem:[%s5 + $0x30] sm:$0xf]
      %v1373 = vld [vmem:[%s5 + $0x34] sm:$0xf]
      %v1374 = vld [vmem:[%s5 + $0x38] sm:$0xf]
      %v1375 = vld [vmem:[%s5 + $0x3c] sm:$0xf]
      %v1380 = vunpack.c.l.b16 %v1372
      %v1381 = vunpack.c.l.b16 %v1373
      %v1382 = vunpack.c.l.b16 %v1374
      %v1383 = vunpack.c.l.b16 %v1375
      %v1384 = vpack.c.b16 %v1381, %v1380
      %v1385 = vpack.c.b16 %v1383, %v1382
      %v1389 = vsel %vm767, %v1371, 0
      %1391 = vmatprep.subr.bf16.mxu0 0
      %1392 = vmatpush1.bf16.msra.mxu0 0
      %1393 = vmatprep.subr.bf16.mxu0 0
      %1394 = vmatpush1.bf16.msra.mxu0 0
      %1395 = vmatprep.subr.bf16.mxu0 0
      %1396 = vmatpush1.bf16.msra.mxu0 0
      %1397 = vmatprep.subr.bf16.mxu0 0
      %1398 = vmatpush1.bf16.msra.mxu0 0
      %1399 = vmatprep.subr.bf16.mxu0 0
      %1400 = vmatpush1.bf16.msra.mxu0 0
      %1401 = vmatprep.subr.bf16.mxu0 0
      %1402 = vmatpush1.bf16.msra.mxu0 0
      %1403 = vmatprep.subr.bf16.mxu0 0
      %1404 = vmatpush1.bf16.msra.mxu0 %v1385
      %1405 = vmatprep.subr.bf16.mxu0 0
      %1406 = vmatpush1.bf16.msra.mxu0 %v1384
      %1407 = vmatprep.subr.bf16.mxu0 0
      %1408 = vmatpush2.bf16.msra.mxu0 0
      %1409 = vmatprep.subr.bf16.mxu0 0
      %1410 = vmatpush2.bf16.msra.mxu0 0
      %1411 = vmatprep.subr.bf16.mxu0 0
      %1412 = vmatpush2.bf16.msra.mxu0 0
      %1413 = vmatprep.subr.bf16.mxu0 0
      %1414 = vmatpush2.bf16.msra.mxu0 0
      %1415 = vmatprep.subr.bf16.mxu0 0
      %1416 = vmatpush2.bf16.msra.mxu0 0
      %1417 = vmatprep.subr.bf16.mxu0 0
      %1418 = vmatpush2.bf16.msra.mxu0 0
      %1419 = vmatprep.subr.bf16.mxu0 0
      %1420 = vmatpush2.bf16.msra.mxu0 0
      %1421 = vmatprep.subr.bf16.mxu0 0
      %1422 = vmatpush2.bf16.msra.mxu0 0
      %1423 = vmatprep.mubr.bf16.mxu0 0
      %1424 = vmatmul.mubr.bf16.gmra.mxu0 %v1389
      %v1425 = vpop.f32.mrf.mxu0
      %v1426 = vadd.f32 0.0, %v1425
      %v1427 = vpop.f32.mrf.mxu0
      %v1428 = vpop.f32.mrf.mxu0
      %v1429 = vpop.f32.mrf.mxu0
      %1430 = vdwg.mxu0
      %v1431 = vadd.f32 %v1370, %v1426
      %v1432 = vld [vmem:[%s6] sm:$0x1]
      %v1434 = vlaneseq
      %v1435 = vshrl.u32 %v1434, 7
      %v1436 = vsub.s32 0, %v1435
      %v1437 = vrot.slane %v1432, %v1436
      %v1439 = vadd.f32 %v1431, %v1437
      %v1440 = vadd.f32 %v437, %v1439
      %v1441 = vld [vmem:[%s7] sm:$0x1]
      %v1442 = vld [vmem:[%s8] sm:$0x1]
      %1443 = vadd.xlane.f32.xlu0 %v1440
      %v1444 = vpop.xlane.xlu0 %1443
      %v1445 = vmul.f32 %v1444, %v442
      %v1446 = vsub.f32 %v1440, %v1445
      %v1447 = vmul.f32 %v1446, %v1446
      %1448 = vadd.xlane.f32.xlu0 %v1447
      %v1449 = vpop.xlane.xlu0 %1448
      %v1450 = vmul.f32 %v1449, %v442
      %v1451 = vadd.f32 %v1450, 1e-05
      %v1452 = vrsqrt.pop %v1451
      %v1453 = vmul.f32 %v1446, %v1452
      %v1455 = vlaneseq
      %v1456 = vshrl.u32 %v1455, 7
      %v1457 = vsub.s32 0, %v1456
      %v1458 = vrot.slane %v1441, %v1457
      %v1460 = vmul.f32 %v1453, %v1458
      %v1462 = vlaneseq
      %v1463 = vshrl.u32 %v1462, 7
      %v1464 = vsub.s32 0, %v1463
      %v1465 = vrot.slane %v1442, %v1464
      %v1467 = vadd.f32 %v1460, %v1465
      %v1468 = vpack.c.bf16 %v1467, %v1467
      %v1469 = vld [vmem:[%s9] sm:$0xff]
      %v1470 = vld [vmem:[%s9 + $0x8] sm:$0xff]
      %v1471 = vld [vmem:[%s9 + $0x10] sm:$0xff]
      %v1472 = vld [vmem:[%s9 + $0x18] sm:$0xff]
      %v1473 = vld [vmem:[%s9 + $0x20] sm:$0xff]
      %v1474 = vld [vmem:[%s9 + $0x28] sm:$0xff]
      %v1475 = vld [vmem:[%s9 + $0x30] sm:$0xff]
      %v1476 = vld [vmem:[%s9 + $0x38] sm:$0xff]
      %v1477 = vld [vmem:[%s9 + $0x40] sm:$0xff]
      %v1478 = vld [vmem:[%s9 + $0x48] sm:$0xff]
      %v1479 = vld [vmem:[%s9 + $0x50] sm:$0xff]
      %v1480 = vld [vmem:[%s9 + $0x58] sm:$0xff]
      %v1481 = vld [vmem:[%s9 + $0x60] sm:$0xff]
      %v1482 = vld [vmem:[%s9 + $0x68] sm:$0xff]
      %v1483 = vld [vmem:[%s9 + $0x70] sm:$0xff]
      %v1484 = vld [vmem:[%s9 + $0x78] sm:$0xff]
      %v1485 = vld [vmem:[%s9 + $0x80] sm:$0xff]
      %v1486 = vld [vmem:[%s9 + $0x88] sm:$0xff]
      %v1487 = vld [vmem:[%s9 + $0x90] sm:$0xff]
      %v1488 = vld [vmem:[%s9 + $0x98] sm:$0xff]
      %v1489 = vld [vmem:[%s9 + $0xa0] sm:$0xff]
      %v1490 = vld [vmem:[%s9 + $0xa8] sm:$0xff]
      %v1491 = vld [vmem:[%s9 + $0xb0] sm:$0xff]
      %v1492 = vld [vmem:[%s9 + $0xb8] sm:$0xff]
      %v1493 = vld [vmem:[%s9 + $0xc0] sm:$0xff]
      %v1494 = vld [vmem:[%s9 + $0xc8] sm:$0xff]
      %v1495 = vld [vmem:[%s9 + $0xd0] sm:$0xff]
      %v1496 = vld [vmem:[%s9 + $0xd8] sm:$0xff]
      %v1497 = vld [vmem:[%s9 + $0xe0] sm:$0xff]
      %v1498 = vld [vmem:[%s9 + $0xe8] sm:$0xff]
      %v1499 = vld [vmem:[%s9 + $0xf0] sm:$0xff]
      %v1500 = vld [vmem:[%s9 + $0xf8] sm:$0xff]
      %v1501 = vld [vmem:[%s10] sm:$0xf]
      %v1503 = vlaneseq
      %v1504 = vshrl.u32 %v1503, 7
      %v1505 = vsub.s32 0, %v1504
      %v1506 = vrot.slane %v1501, %v1505
      %v1507 = vlaneseq
      %v1508 = vshrl.u32 %v1507, 7
      %v1509 = vsub.s32 1, %v1508
      %v1510 = vrot.slane %v1501, %v1509
      %v1511 = vlaneseq
      %v1512 = vshrl.u32 %v1511, 7
      %v1513 = vsub.s32 2, %v1512
      %v1514 = vrot.slane %v1501, %v1513
      %v1515 = vlaneseq
      %v1516 = vshrl.u32 %v1515, 7
      %v1517 = vsub.s32 3, %v1516
      %v1518 = vrot.slane %v1501, %v1517
      %v1555 = vunpack.c.l.b16 %v1469
      %v1556 = vunpack.c.h.b16 %v1469
      %v1557 = vunpack.c.l.b16 %v1470
      %v1558 = vunpack.c.h.b16 %v1470
      %v1559 = vunpack.c.l.b16 %v1471
      %v1560 = vunpack.c.h.b16 %v1471
      %v1561 = vunpack.c.l.b16 %v1472
      %v1562 = vunpack.c.h.b16 %v1472
      %v1563 = vunpack.c.l.b16 %v1473
      %v1564 = vunpack.c.h.b16 %v1473
      %v1565 = vunpack.c.l.b16 %v1474
      %v1566 = vunpack.c.h.b16 %v1474
      %v1567 = vunpack.c.l.b16 %v1475
      %v1568 = vunpack.c.h.b16 %v1475
      %v1569 = vunpack.c.l.b16 %v1476
      %v1570 = vunpack.c.h.b16 %v1476
      %v1571 = vunpack.c.l.b16 %v1477
      %v1572 = vunpack.c.h.b16 %v1477
      %v1573 = vunpack.c.l.b16 %v1478
      %v1574 = vunpack.c.h.b16 %v1478
      %v1575 = vunpack.c.l.b16 %v1479
      %v1576 = vunpack.c.h.b16 %v1479
      %v1577 = vunpack.c.l.b16 %v1480
      %v1578 = vunpack.c.h.b16 %v1480
      %v1579 = vunpack.c.l.b16 %v1481
      %v1580 = vunpack.c.h.b16 %v1481
      %v1581 = vunpack.c.l.b16 %v1482
      %v1582 = vunpack.c.h.b16 %v1482
      %v1583 = vunpack.c.l.b16 %v1483
      %v1584 = vunpack.c.h.b16 %v1483
      %v1585 = vunpack.c.l.b16 %v1484
      %v1586 = vunpack.c.h.b16 %v1484
      %v1587 = vunpack.c.l.b16 %v1485
      %v1588 = vunpack.c.h.b16 %v1485
      %v1589 = vunpack.c.l.b16 %v1486
      %v1590 = vunpack.c.h.b16 %v1486
      %v1591 = vunpack.c.l.b16 %v1487
      %v1592 = vunpack.c.h.b16 %v1487
      %v1593 = vunpack.c.l.b16 %v1488
      %v1594 = vunpack.c.h.b16 %v1488
      %v1595 = vunpack.c.l.b16 %v1489
      %v1596 = vunpack.c.h.b16 %v1489
      %v1597 = vunpack.c.l.b16 %v1490
      %v1598 = vunpack.c.h.b16 %v1490
      %v1599 = vunpack.c.l.b16 %v1491
      %v1600 = vunpack.c.h.b16 %v1491
      %v1601 = vunpack.c.l.b16 %v1492
      %v1602 = vunpack.c.h.b16 %v1492
      %v1603 = vunpack.c.l.b16 %v1493
      %v1604 = vunpack.c.h.b16 %v1493
      %v1605 = vunpack.c.l.b16 %v1494
      %v1606 = vunpack.c.h.b16 %v1494
      %v1607 = vunpack.c.l.b16 %v1495
      %v1608 = vunpack.c.h.b16 %v1495
      %v1609 = vunpack.c.l.b16 %v1496
      %v1610 = vunpack.c.h.b16 %v1496
      %v1611 = vunpack.c.l.b16 %v1497
      %v1612 = vunpack.c.h.b16 %v1497
      %v1613 = vunpack.c.l.b16 %v1498
      %v1614 = vunpack.c.h.b16 %v1498
      %v1615 = vunpack.c.l.b16 %v1499
      %v1616 = vunpack.c.h.b16 %v1499
      %v1617 = vunpack.c.l.b16 %v1500
      %v1618 = vunpack.c.h.b16 %v1500
      %v1619 = vpack.c.b16 %v1559, %v1555
      %v1620 = vpack.c.b16 %v1560, %v1556
      %v1621 = vpack.c.b16 %v1561, %v1557
      %v1622 = vpack.c.b16 %v1562, %v1558
      %v1623 = vpack.c.b16 %v1567, %v1563
      %v1624 = vpack.c.b16 %v1568, %v1564
      %v1625 = vpack.c.b16 %v1569, %v1565
      %v1626 = vpack.c.b16 %v1570, %v1566
      %v1627 = vpack.c.b16 %v1575, %v1571
      %v1628 = vpack.c.b16 %v1576, %v1572
      %v1629 = vpack.c.b16 %v1577, %v1573
      %v1630 = vpack.c.b16 %v1578, %v1574
      %v1631 = vpack.c.b16 %v1583, %v1579
      %v1632 = vpack.c.b16 %v1584, %v1580
      %v1633 = vpack.c.b16 %v1585, %v1581
      %v1634 = vpack.c.b16 %v1586, %v1582
      %v1635 = vpack.c.b16 %v1591, %v1587
      %v1636 = vpack.c.b16 %v1592, %v1588
      %v1637 = vpack.c.b16 %v1593, %v1589
      %v1638 = vpack.c.b16 %v1594, %v1590
      %v1639 = vpack.c.b16 %v1599, %v1595
      %v1640 = vpack.c.b16 %v1600, %v1596
      %v1641 = vpack.c.b16 %v1601, %v1597
      %v1642 = vpack.c.b16 %v1602, %v1598
      %v1643 = vpack.c.b16 %v1607, %v1603
      %v1644 = vpack.c.b16 %v1608, %v1604
      %v1645 = vpack.c.b16 %v1609, %v1605
      %v1646 = vpack.c.b16 %v1610, %v1606
      %v1647 = vpack.c.b16 %v1615, %v1611
      %v1648 = vpack.c.b16 %v1616, %v1612
      %v1649 = vpack.c.b16 %v1617, %v1613
      %v1650 = vpack.c.b16 %v1618, %v1614
      %1683 = vmatprep.subr.bf16.mxu0 %v1648
      %1684 = vmatpush1.bf16.msra.mxu0 %v1647
      %1685 = vmatprep.subr.bf16.mxu0 %v1644
      %1686 = vmatpush1.bf16.msra.mxu0 %v1643
      %1687 = vmatprep.subr.bf16.mxu0 %v1640
      %1688 = vmatpush1.bf16.msra.mxu0 %v1639
      %1689 = vmatprep.subr.bf16.mxu0 %v1636
      %1690 = vmatpush1.bf16.msra.mxu0 %v1635
      %1691 = vmatprep.subr.bf16.mxu0 %v1632
      %1692 = vmatpush1.bf16.msra.mxu0 %v1631
      %1693 = vmatprep.subr.bf16.mxu0 %v1628
      %1694 = vmatpush1.bf16.msra.mxu0 %v1627
      %1695 = vmatprep.subr.bf16.mxu0 %v1624
      %1696 = vmatpush1.bf16.msra.mxu0 %v1623
      %1697 = vmatprep.subr.bf16.mxu0 %v1620
      %1698 = vmatpush1.bf16.msra.mxu0 %v1619
      %1699 = vmatprep.subr.bf16.mxu0 0
      %1700 = vmatpush2.bf16.msra.mxu0 0
      %1701 = vmatprep.subr.bf16.mxu0 0
      %1702 = vmatpush2.bf16.msra.mxu0 0
      %1703 = vmatprep.subr.bf16.mxu0 0
      %1704 = vmatpush2.bf16.msra.mxu0 0
      %1705 = vmatprep.subr.bf16.mxu0 0
      %1706 = vmatpush2.bf16.msra.mxu0 0
      %1707 = vmatprep.subr.bf16.mxu0 0
      %1708 = vmatpush2.bf16.msra.mxu0 0
      %1709 = vmatprep.subr.bf16.mxu0 0
      %1710 = vmatpush2.bf16.msra.mxu0 0
      %1711 = vmatprep.subr.bf16.mxu0 0
      %1712 = vmatpush2.bf16.msra.mxu0 0
      %1713 = vmatprep.subr.bf16.mxu0 0
      %1714 = vmatpush2.bf16.msra.mxu0 0
      %1715 = vmatprep.mubr.bf16.mxu0 0
      %1716 = vmatmul.mubr.bf16.gmra.mxu0 %v1468
      %v1717 = vpop.f32.mrf.mxu0
      %v1718 = vadd.f32 %v1506, %v1717
      %v1719 = vpop.f32.mrf.mxu0
      %v1720 = vadd.f32 %v1510, %v1719
      %v1721 = vpop.f32.mrf.mxu0
      %v1722 = vpop.f32.mrf.mxu0
      %1723 = vdwg.mxu0
      %1724 = vmatprep.subr.bf16.mxu0 %v1650
      %1725 = vmatpush1.bf16.msra.mxu0 %v1649
      %1726 = vmatprep.subr.bf16.mxu0 %v1646
      %1727 = vmatpush1.bf16.msra.mxu0 %v1645
      %1728 = vmatprep.subr.bf16.mxu0 %v1642
      %1729 = vmatpush1.bf16.msra.mxu0 %v1641
      %1730 = vmatprep.subr.bf16.mxu0 %v1638
      %1731 = vmatpush1.bf16.msra.mxu0 %v1637
      %1732 = vmatprep.subr.bf16.mxu0 %v1634
      %1733 = vmatpush1.bf16.msra.mxu0 %v1633
      %1734 = vmatprep.subr.bf16.mxu0 %v1630
      %1735 = vmatpush1.bf16.msra.mxu0 %v1629
      %1736 = vmatprep.subr.bf16.mxu0 %v1626
      %1737 = vmatpush1.bf16.msra.mxu0 %v1625
      %1738 = vmatprep.subr.bf16.mxu0 %v1622
      %1739 = vmatpush1.bf16.msra.mxu0 %v1621
      %1740 = vmatprep.subr.bf16.mxu0 0
      %1741 = vmatpush2.bf16.msra.mxu0 0
      %1742 = vmatprep.subr.bf16.mxu0 0
      %1743 = vmatpush2.bf16.msra.mxu0 0
      %1744 = vmatprep.subr.bf16.mxu0 0
      %1745 = vmatpush2.bf16.msra.mxu0 0
      %1746 = vmatprep.subr.bf16.mxu0 0
      %1747 = vmatpush2.bf16.msra.mxu0 0
      %1748 = vmatprep.subr.bf16.mxu0 0
      %1749 = vmatpush2.bf16.msra.mxu0 0
      %1750 = vmatprep.subr.bf16.mxu0 0
      %1751 = vmatpush2.bf16.msra.mxu0 0
      %1752 = vmatprep.subr.bf16.mxu0 0
      %1753 = vmatpush2.bf16.msra.mxu0 0
      %1754 = vmatprep.subr.bf16.mxu0 0
      %1755 = vmatpush2.bf16.msra.mxu0 0
      %1756 = vmatprep.mubr.bf16.mxu0 0
      %1757 = vmatmul.mubr.bf16.gmra.mxu0 %v1468
      %v1758 = vpop.f32.mrf.mxu0
      %v1759 = vadd.f32 %v1514, %v1758
      %v1760 = vpop.f32.mrf.mxu0
      %v1761 = vadd.f32 %v1518, %v1760
      %v1762 = vpop.f32.mrf.mxu0
      %v1763 = vpop.f32.mrf.mxu0
      %1764 = vdwg.mxu0
      %v1765 = vmul.f32 %v1718, 0.5
      %v1766 = vmul.f32 %v1720, 0.5
      %v1767 = vmul.f32 %v1759, 0.5
      %v1768 = vmul.f32 %v1761, 0.5
      %v1769 = vmul.f32 %v1718, 0.044715
      %v1770 = vmul.f32 %v1720, 0.044715
      %v1771 = vmul.f32 %v1759, 0.044715
      %v1772 = vmul.f32 %v1761, 0.044715
      %v1773 = vmul.f32 %v1769, %v1718
      %v1774 = vmul.f32 %v1770, %v1720
      %v1775 = vmul.f32 %v1771, %v1759
      %v1776 = vmul.f32 %v1772, %v1761
      %v1777 = vmul.f32 %v1773, %v1718
      %v1778 = vmul.f32 %v1774, %v1720
      %v1779 = vmul.f32 %v1775, %v1759
      %v1780 = vmul.f32 %v1776, %v1761
      %v1781 = vadd.f32 %v1718, %v1777
      %v1782 = vadd.f32 %v1720, %v1778
      %v1783 = vadd.f32 %v1759, %v1779
      %v1784 = vadd.f32 %v1761, %v1780
      %v1785 = vmul.f32 %v1781, 0.7978846
      %v1786 = vmul.f32 %v1782, 0.7978846
      %v1787 = vmul.f32 %v1783, 0.7978846
      %v1788 = vmul.f32 %v1784, 0.7978846
      %v1789 = vtanh.pop %v1785
      %v1790 = vtanh.pop %v1786
      %v1791 = vtanh.pop %v1787
      %v1792 = vtanh.pop %v1788
      %v1793 = vadd.f32 %v1789, 1.0
      %v1794 = vadd.f32 %v1790, 1.0
      %v1795 = vadd.f32 %v1791, 1.0
      %v1796 = vadd.f32 %v1792, 1.0
      %v1797 = vmul.f32 %v1765, %v1793
      %v1798 = vmul.f32 %v1766, %v1794
      %v1799 = vmul.f32 %v1767, %v1795
      %v1800 = vmul.f32 %v1768, %v1796
      %v1801 = vpack.c.bf16 %v1797, %v1797
      %v1802 = vpack.c.bf16 %v1798, %v1798
      %v1803 = vpack.c.bf16 %v1799, %v1799
      %v1804 = vpack.c.bf16 %v1800, %v1800
      %v1805 = vld [vmem:[%s11] sm:$0xf]
      %v1806 = vld [vmem:[%s11 + $0x4] sm:$0xf]
      %v1807 = vld [vmem:[%s11 + $0x8] sm:$0xf]
      %v1808 = vld [vmem:[%s11 + $0xc] sm:$0xf]
      %v1809 = vld [vmem:[%s11 + $0x10] sm:$0xf]
      %v1810 = vld [vmem:[%s11 + $0x14] sm:$0xf]
      %v1811 = vld [vmem:[%s11 + $0x18] sm:$0xf]
      %v1812 = vld [vmem:[%s11 + $0x1c] sm:$0xf]
      %v1813 = vld [vmem:[%s11 + $0x20] sm:$0xf]
      %v1814 = vld [vmem:[%s11 + $0x24] sm:$0xf]
      %v1815 = vld [vmem:[%s11 + $0x28] sm:$0xf]
      %v1816 = vld [vmem:[%s11 + $0x2c] sm:$0xf]
      %v1817 = vld [vmem:[%s11 + $0x30] sm:$0xf]
      %v1818 = vld [vmem:[%s11 + $0x34] sm:$0xf]
      %v1819 = vld [vmem:[%s11 + $0x38] sm:$0xf]
      %v1820 = vld [vmem:[%s11 + $0x3c] sm:$0xf]
      %v1821 = vld [vmem:[%s11 + $0x40] sm:$0xf]
      %v1822 = vld [vmem:[%s11 + $0x44] sm:$0xf]
      %v1823 = vld [vmem:[%s11 + $0x48] sm:$0xf]
      %v1824 = vld [vmem:[%s11 + $0x4c] sm:$0xf]
      %v1825 = vld [vmem:[%s11 + $0x50] sm:$0xf]
      %v1826 = vld [vmem:[%s11 + $0x54] sm:$0xf]
      %v1827 = vld [vmem:[%s11 + $0x58] sm:$0xf]
      %v1828 = vld [vmem:[%s11 + $0x5c] sm:$0xf]
      %v1829 = vld [vmem:[%s11 + $0x60] sm:$0xf]
      %v1830 = vld [vmem:[%s11 + $0x64] sm:$0xf]
      %v1831 = vld [vmem:[%s11 + $0x68] sm:$0xf]
      %v1832 = vld [vmem:[%s11 + $0x6c] sm:$0xf]
      %v1833 = vld [vmem:[%s11 + $0x70] sm:$0xf]
      %v1834 = vld [vmem:[%s11 + $0x74] sm:$0xf]
      %v1835 = vld [vmem:[%s11 + $0x78] sm:$0xf]
      %v1836 = vld [vmem:[%s11 + $0x7c] sm:$0xf]
      %v1837 = vld [vmem:[%s11 + $0x80] sm:$0xf]
      %v1838 = vld [vmem:[%s11 + $0x84] sm:$0xf]
      %v1839 = vld [vmem:[%s11 + $0x88] sm:$0xf]
      %v1840 = vld [vmem:[%s11 + $0x8c] sm:$0xf]
      %v1841 = vld [vmem:[%s11 + $0x90] sm:$0xf]
      %v1842 = vld [vmem:[%s11 + $0x94] sm:$0xf]
      %v1843 = vld [vmem:[%s11 + $0x98] sm:$0xf]
      %v1844 = vld [vmem:[%s11 + $0x9c] sm:$0xf]
      %v1845 = vld [vmem:[%s11 + $0xa0] sm:$0xf]
      %v1846 = vld [vmem:[%s11 + $0xa4] sm:$0xf]
      %v1847 = vld [vmem:[%s11 + $0xa8] sm:$0xf]
      %v1848 = vld [vmem:[%s11 + $0xac] sm:$0xf]
      %v1849 = vld [vmem:[%s11 + $0xb0] sm:$0xf]
      %v1850 = vld [vmem:[%s11 + $0xb4] sm:$0xf]
      %v1851 = vld [vmem:[%s11 + $0xb8] sm:$0xf]
      %v1852 = vld [vmem:[%s11 + $0xbc] sm:$0xf]
      %v1853 = vld [vmem:[%s11 + $0xc0] sm:$0xf]
      %v1854 = vld [vmem:[%s11 + $0xc4] sm:$0xf]
      %v1855 = vld [vmem:[%s11 + $0xc8] sm:$0xf]
      %v1856 = vld [vmem:[%s11 + $0xcc] sm:$0xf]
      %v1857 = vld [vmem:[%s11 + $0xd0] sm:$0xf]
      %v1858 = vld [vmem:[%s11 + $0xd4] sm:$0xf]
      %v1859 = vld [vmem:[%s11 + $0xd8] sm:$0xf]
      %v1860 = vld [vmem:[%s11 + $0xdc] sm:$0xf]
      %v1861 = vld [vmem:[%s11 + $0xe0] sm:$0xf]
      %v1862 = vld [vmem:[%s11 + $0xe4] sm:$0xf]
      %v1863 = vld [vmem:[%s11 + $0xe8] sm:$0xf]
      %v1864 = vld [vmem:[%s11 + $0xec] sm:$0xf]
      %v1865 = vld [vmem:[%s11 + $0xf0] sm:$0xf]
      %v1866 = vld [vmem:[%s11 + $0xf4] sm:$0xf]
      %v1867 = vld [vmem:[%s11 + $0xf8] sm:$0xf]
      %v1868 = vld [vmem:[%s11 + $0xfc] sm:$0xf]
      %v1869 = vld [vmem:[%s12] sm:$0x1]
      %v1871 = vlaneseq
      %v1872 = vshrl.u32 %v1871, 7
      %v1873 = vsub.s32 0, %v1872
      %v1874 = vrot.slane %v1869, %v1873
      %v1940 = vunpack.c.l.b16 %v1805
      %v1941 = vunpack.c.l.b16 %v1806
      %v1942 = vunpack.c.l.b16 %v1807
      %v1943 = vunpack.c.l.b16 %v1808
      %v1944 = vunpack.c.l.b16 %v1809
      %v1945 = vunpack.c.l.b16 %v1810
      %v1946 = vunpack.c.l.b16 %v1811
      %v1947 = vunpack.c.l.b16 %v1812
      %v1948 = vunpack.c.l.b16 %v1813
      %v1949 = vunpack.c.l.b16 %v1814
      %v1950 = vunpack.c.l.b16 %v1815
      %v1951 = vunpack.c.l.b16 %v1816
      %v1952 = vunpack.c.l.b16 %v1817
      %v1953 = vunpack.c.l.b16 %v1818
      %v1954 = vunpack.c.l.b16 %v1819
      %v1955 = vunpack.c.l.b16 %v1820
      %v1956 = vunpack.c.l.b16 %v1821
      %v1957 = vunpack.c.l.b16 %v1822
      %v1958 = vunpack.c.l.b16 %v1823
      %v1959 = vunpack.c.l.b16 %v1824
      %v1960 = vunpack.c.l.b16 %v1825
      %v1961 = vunpack.c.l.b16 %v1826
      %v1962 = vunpack.c.l.b16 %v1827
      %v1963 = vunpack.c.l.b16 %v1828
      %v1964 = vunpack.c.l.b16 %v1829
      %v1965 = vunpack.c.l.b16 %v1830
      %v1966 = vunpack.c.l.b16 %v1831
      %v1967 = vunpack.c.l.b16 %v1832
      %v1968 = vunpack.c.l.b16 %v1833
      %v1969 = vunpack.c.l.b16 %v1834
      %v1970 = vunpack.c.l.b16 %v1835
      %v1971 = vunpack.c.l.b16 %v1836
      %v1972 = vunpack.c.l.b16 %v1837
      %v1973 = vunpack.c.l.b16 %v1838
      %v1974 = vunpack.c.l.b16 %v1839
      %v1975 = vunpack.c.l.b16 %v1840
      %v1976 = vunpack.c.l.b16 %v1841
      %v1977 = vunpack.c.l.b16 %v1842
      %v1978 = vunpack.c.l.b16 %v1843
      %v1979 = vunpack.c.l.b16 %v1844
      %v1980 = vunpack.c.l.b16 %v1845
      %v1981 = vunpack.c.l.b16 %v1846
      %v1982 = vunpack.c.l.b16 %v1847
      %v1983 = vunpack.c.l.b16 %v1848
      %v1984 = vunpack.c.l.b16 %v1849
      %v1985 = vunpack.c.l.b16 %v1850
      %v1986 = vunpack.c.l.b16 %v1851
      %v1987 = vunpack.c.l.b16 %v1852
      %v1988 = vunpack.c.l.b16 %v1853
      %v1989 = vunpack.c.l.b16 %v1854
      %v1990 = vunpack.c.l.b16 %v1855
      %v1991 = vunpack.c.l.b16 %v1856
      %v1992 = vunpack.c.l.b16 %v1857
      %v1993 = vunpack.c.l.b16 %v1858
      %v1994 = vunpack.c.l.b16 %v1859
      %v1995 = vunpack.c.l.b16 %v1860
      %v1996 = vunpack.c.l.b16 %v1861
      %v1997 = vunpack.c.l.b16 %v1862
      %v1998 = vunpack.c.l.b16 %v1863
      %v1999 = vunpack.c.l.b16 %v1864
      %v2000 = vunpack.c.l.b16 %v1865
      %v2001 = vunpack.c.l.b16 %v1866
      %v2002 = vunpack.c.l.b16 %v1867
      %v2003 = vunpack.c.l.b16 %v1868
      %v2004 = vpack.c.b16 %v1941, %v1940
      %v2005 = vpack.c.b16 %v1943, %v1942
      %v2006 = vpack.c.b16 %v1945, %v1944
      %v2007 = vpack.c.b16 %v1947, %v1946
      %v2008 = vpack.c.b16 %v1949, %v1948
      %v2009 = vpack.c.b16 %v1951, %v1950
      %v2010 = vpack.c.b16 %v1953, %v1952
      %v2011 = vpack.c.b16 %v1955, %v1954
      %v2012 = vpack.c.b16 %v1957, %v1956
      %v2013 = vpack.c.b16 %v1959, %v1958
      %v2014 = vpack.c.b16 %v1961, %v1960
      %v2015 = vpack.c.b16 %v1963, %v1962
      %v2016 = vpack.c.b16 %v1965, %v1964
      %v2017 = vpack.c.b16 %v1967, %v1966
      %v2018 = vpack.c.b16 %v1969, %v1968
      %v2019 = vpack.c.b16 %v1971, %v1970
      %v2020 = vpack.c.b16 %v1973, %v1972
      %v2021 = vpack.c.b16 %v1975, %v1974
      %v2022 = vpack.c.b16 %v1977, %v1976
      %v2023 = vpack.c.b16 %v1979, %v1978
      %v2024 = vpack.c.b16 %v1981, %v1980
      %v2025 = vpack.c.b16 %v1983, %v1982
      %v2026 = vpack.c.b16 %v1985, %v1984
      %v2027 = vpack.c.b16 %v1987, %v1986
      %v2028 = vpack.c.b16 %v1989, %v1988
      %v2029 = vpack.c.b16 %v1991, %v1990
      %v2030 = vpack.c.b16 %v1993, %v1992
      %v2031 = vpack.c.b16 %v1995, %v1994
      %v2032 = vpack.c.b16 %v1997, %v1996
      %v2033 = vpack.c.b16 %v1999, %v1998
      %v2034 = vpack.c.b16 %v2001, %v2000
      %v2035 = vpack.c.b16 %v2003, %v2002
      %2068 = vmatprep.subr.bf16.mxu0 0
      %2069 = vmatpush1.bf16.msra.mxu0 %v2011
      %2070 = vmatprep.subr.bf16.mxu0 0
      %2071 = vmatpush1.bf16.msra.mxu0 %v2010
      %2072 = vmatprep.subr.bf16.mxu0 0
      %2073 = vmatpush1.bf16.msra.mxu0 %v2009
      %2074 = vmatprep.subr.bf16.mxu0 0
      %2075 = vmatpush1.bf16.msra.mxu0 %v2008
      %2076 = vmatprep.subr.bf16.mxu0 0
      %2077 = vmatpush1.bf16.msra.mxu0 %v2007
      %2078 = vmatprep.subr.bf16.mxu0 0
      %2079 = vmatpush1.bf16.msra.mxu0 %v2006
      %2080 = vmatprep.subr.bf16.mxu0 0
      %2081 = vmatpush1.bf16.msra.mxu0 %v2005
      %2082 = vmatprep.subr.bf16.mxu0 0
      %2083 = vmatpush1.bf16.msra.mxu0 %v2004
      %2084 = vmatprep.subr.bf16.mxu0 0
      %2085 = vmatpush2.bf16.msra.mxu0 %v2019
      %2086 = vmatprep.subr.bf16.mxu0 0
      %2087 = vmatpush2.bf16.msra.mxu0 %v2018
      %2088 = vmatprep.subr.bf16.mxu0 0
      %2089 = vmatpush2.bf16.msra.mxu0 %v2017
      %2090 = vmatprep.subr.bf16.mxu0 0
      %2091 = vmatpush2.bf16.msra.mxu0 %v2016
      %2092 = vmatprep.subr.bf16.mxu0 0
      %2093 = vmatpush2.bf16.msra.mxu0 %v2015
      %2094 = vmatprep.subr.bf16.mxu0 0
      %2095 = vmatpush2.bf16.msra.mxu0 %v2014
      %2096 = vmatprep.subr.bf16.mxu0 0
      %2097 = vmatpush2.bf16.msra.mxu0 %v2013
      %2098 = vmatprep.subr.bf16.mxu0 0
      %2099 = vmatpush2.bf16.msra.mxu0 %v2012
      %2100 = vmatprep.mubr.bf16.mxu0 %v1802
      %2101 = vmatmul.mubr.bf16.gmra.mxu0 %v1801
      %v2102 = vpop.f32.mrf.mxu0
      %v2103 = vadd.f32 %v1874, %v2102
      %v2104 = vpop.f32.mrf.mxu0
      %v2105 = vpop.f32.mrf.mxu0
      %v2106 = vpop.f32.mrf.mxu0
      %2107 = vdwg.mxu0
      %2108 = vmatprep.subr.bf16.mxu0 0
      %2109 = vmatpush1.bf16.msra.mxu0 %v2027
      %2110 = vmatprep.subr.bf16.mxu0 0
      %2111 = vmatpush1.bf16.msra.mxu0 %v2026
      %2112 = vmatprep.subr.bf16.mxu0 0
      %2113 = vmatpush1.bf16.msra.mxu0 %v2025
      %2114 = vmatprep.subr.bf16.mxu0 0
      %2115 = vmatpush1.bf16.msra.mxu0 %v2024
      %2116 = vmatprep.subr.bf16.mxu0 0
      %2117 = vmatpush1.bf16.msra.mxu0 %v2023
      %2118 = vmatprep.subr.bf16.mxu0 0
      %2119 = vmatpush1.bf16.msra.mxu0 %v2022
      %2120 = vmatprep.subr.bf16.mxu0 0
      %2121 = vmatpush1.bf16.msra.mxu0 %v2021
      %2122 = vmatprep.subr.bf16.mxu0 0
      %2123 = vmatpush1.bf16.msra.mxu0 %v2020
      %2124 = vmatprep.subr.bf16.mxu0 0
      %2125 = vmatpush2.bf16.msra.mxu0 %v2035
      %2126 = vmatprep.subr.bf16.mxu0 0
      %2127 = vmatpush2.bf16.msra.mxu0 %v2034
      %2128 = vmatprep.subr.bf16.mxu0 0
      %2129 = vmatpush2.bf16.msra.mxu0 %v2033
      %2130 = vmatprep.subr.bf16.mxu0 0
      %2131 = vmatpush2.bf16.msra.mxu0 %v2032
      %2132 = vmatprep.subr.bf16.mxu0 0
      %2133 = vmatpush2.bf16.msra.mxu0 %v2031
      %2134 = vmatprep.subr.bf16.mxu0 0
      %2135 = vmatpush2.bf16.msra.mxu0 %v2030
      %2136 = vmatprep.subr.bf16.mxu0 0
      %2137 = vmatpush2.bf16.msra.mxu0 %v2029
      %2138 = vmatprep.subr.bf16.mxu0 0
      %2139 = vmatpush2.bf16.msra.mxu0 %v2028
      %2140 = vmatprep.mubr.bf16.mxu0 %v1804
      %2141 = vmatmul.mubr.bf16.gmra.mxu0 %v1803
      %v2142 = vpop.f32.mrf.mxu0
      %v2143 = vadd.f32 %v2103, %v2142
      %v2144 = vpop.f32.mrf.mxu0
      %v2145 = vpop.f32.mrf.mxu0
      %v2146 = vpop.f32.mrf.mxu0
      %2147 = vdwg.mxu0
      %v2148 = vadd.f32 %v1440, %v2143
      %2149 = vst [vmem:[%s435] sm:$0xff] %v2148
      %p2150 = scmp.lt.s32.totalorder %s24, 1
      %s2151 = scalar_select %p2150, %s24, 1
      %s2152 = smul.addr %s2151, 8
      %s2153 = scalar_lea.vmem %s13, %s2152
      // Predicated region
      $region73: #{peft_transformer_forward.2} parent=71 // pred_check
        %p2154 = pneg %p320
      $region74: #{peft_transformer_forward.2} parent=71 // pred_check_branch
        %2156 = sbr.rel (%p2154) target = $region76
      $region75: #{peft_transformer_forward.2} parent=71 // pred_region
        _
      $region76: #{peft_transformer_forward.2} parent=71 // pred_fallthru
        _
    $region72: #{peft_transformer_forward.2} parent=5 // pred_fallthru
      _
    %p2157 = scmp.le.s32.totalorder 2, %s19
    // Predicated region
    $region77: #{peft_transformer_forward.2} parent=5 // pred_check
      %p2158 = pneg %p2157
    $region78: #{peft_transformer_forward.2} parent=5 // pred_check_branch
      %2160 = sbr.rel (%p2158) target = $region80
    $region79: #{peft_transformer_forward.2} parent=5 // pred_region
      %s2161 = ssub.s32 %s19, 2
      // Predicated region
      $region81: #{peft_transformer_forward.2} parent=79 // pred_check
        %p2162 = pneg %p326
      $region82: #{peft_transformer_forward.2} parent=79 // pred_check_branch
        %2164 = sbr.rel (%p2162) target = $region84
      $region83: #{peft_transformer_forward.2} parent=79 // pred_region
        %p2165 = scmp.lt.s32.totalorder %s25, 1
        %s2166 = scalar_select %p2165, %s25, 1
        %s2167 = smul.addr %s2166, 8
        %s2168 = scalar_lea.vmem %s13, %s2167
      $region84: #{peft_transformer_forward.2} parent=79 // pred_fallthru
        _
    $region80: #{peft_transformer_forward.2} parent=5 // pred_fallthru
      _
  $region6: #{peft_transformer_forward.2} parent=0 // loop_footer
    %s23 = sadd.s32 1, %s19
  $region7: #{peft_transformer_forward.2} parent=0 // loop_footer_branch
    %18 = sbr.rel target = $region3
  $region8: #{peft_transformer_forward.2} parent=0 // loop_exit
    _

</llo_original>
